<compile_context>
chip_gen: v7x
topology: tpu7x:2x2x1
jax: 0.10.0
libtpu: 0.0.40
codegen_flags: <defaults>
</compile_context>

<pallas_src>
import functools

import jax
import jax.numpy as jnp
from jax import lax
from jax.experimental import pallas as pl
from jax.experimental.pallas import tpu as pltpu

LANE = 128  # TPU lane width; conv output channels are padded to this.


# ---------------------------------------------------------------------------
# Pallas kernel: fused  (patches @ weight) + {bias | InstanceNorm} + LeakyReLU
# One grid step per batch element.
# ---------------------------------------------------------------------------
def _conv_fused_kernel(p_ref, w_ref, *rest, mode, eps, slope):
    o_ref = rest[-1]
    x = p_ref[0]                                                   # (S, K)
    acc = jnp.dot(x, w_ref[...], preferred_element_type=jnp.float32)  # (S, N)
    if mode == "bias":
        acc = acc + rest[0][...]                                   # (1, N) broadcast
    elif mode == "inorm":
        # InstanceNorm2d(affine=True): per-(batch, channel) stats over spatial,
        # biased variance, eps inside rsqrt — matches PyTorch semantics.
        mean = jnp.mean(acc, axis=0, keepdims=True)                # (1, N)
        var = jnp.mean(jnp.square(acc - mean), axis=0, keepdims=True)
        acc = (acc - mean) * lax.rsqrt(var + eps) * rest[0][...] + rest[1][...]
    if slope is not None:
        acc = jnp.where(acc > 0, acc, slope * acc)                 # LeakyReLU
    o_ref[0] = acc.astype(o_ref.dtype)


def _extract_patches_nhwc(x, k, stride, pad):
    """NHWC im2col: strided slices concatenated along the channel (lane) axis.

    Returns (B, Ho*Wo, k*k*C) with K ordered (kh, kw, c)."""
    B, H, W, C = x.shape
    Ho = (H + 2 * pad - k) // stride + 1
    Wo = (W + 2 * pad - k) // stride + 1
    xp = jnp.pad(x, ((0, 0), (pad, pad), (pad, pad), (0, 0))) if pad else x
    cols = [xp[:, i:i + stride * Ho:stride, j:j + stride * Wo:stride, :]
            for i in range(k) for j in range(k)]
    patches = jnp.concatenate(cols, axis=-1)                       # (B, Ho, Wo, k*k*C)
    return patches.reshape(B, Ho * Wo, k * k * C), Ho, Wo


def prep_conv_weight(w, cin_pad, cout_pad):
    """PyTorch (Cout, Cin, k, k) -> (k*k*cin_pad, cout_pad), K order (kh, kw, c)."""
    cout, cin, k, _ = w.shape
    w = jnp.transpose(w, (2, 3, 1, 0))                             # (kh, kw, cin, cout)
    w = jnp.pad(w, ((0, 0), (0, 0), (0, cin_pad - cin), (0, cout_pad - cout)))
    return w.reshape(k * k * cin_pad, cout_pad)


def _pad_vec(v, n):
    return jnp.pad(v, (0, n - v.shape[0])).reshape(1, n)


def conv_block(x_nhwc, w_kn, scales, *, k, stride, pad, mode, slope, eps=1e-5):
    """x_nhwc: (B, H, W, Cp) channel-padded NHWC.  w_kn: (k*k*Cp, Np).
       scales: tuple of (1, Np) arrays (bias) or (gamma, beta).
       Returns (B, Ho, Wo, Np) NHWC activation (channel-padded, lane-dense)."""
    B, H, W, Cp = x_nhwc.shape
    K, N = w_kn.shape
    assert K == k * k * Cp
    patches, Ho, Wo = _extract_patches_nhwc(x_nhwc, k, stride, pad)
    S = Ho * Wo
    out = pl.pallas_call(
        functools.partial(_conv_fused_kernel, mode=mode, eps=eps, slope=slope),
        out_shape=jax.ShapeDtypeStruct((B, S, N), jnp.float32),
        grid=(B,),
        in_specs=[pl.BlockSpec((1, S, K), lambda b: (b, 0, 0)),
                  pl.BlockSpec((K, N), lambda b: (0, 0))]
                 + [pl.BlockSpec((1, N), lambda b: (0, 0)) for _ in scales],
        out_specs=pl.BlockSpec((1, S, N), lambda b: (b, 0, 0)),
        compiler_params=pltpu.CompilerParams(
            dimension_semantics=("parallel",),
            vmem_limit_bytes=32 * 1024 * 1024),
    )(patches, w_kn, *scales)
    return out.reshape(B, Ho, Wo, N)


# ---------------------------------------------------------------------------
# Pallas kernel: Linear (latent_joining) — lane-dense (B, H*W) output
# ---------------------------------------------------------------------------
def _linear_kernel(x_ref, w_ref, b_ref, o_ref):
    acc = jnp.dot(x_ref[...], w_ref[...], preferred_element_type=jnp.float32)
    o_ref[...] = (acc + b_ref[...]).astype(o_ref.dtype)


def pallas_linear(x, w, b):
    M, Kin = x.shape
    _, N = w.shape
    return pl.pallas_call(
        _linear_kernel,
        out_shape=jax.ShapeDtypeStruct((M, N), jnp.float32),
        grid=(1,),
        in_specs=[pl.BlockSpec((M, Kin), lambda i: (0, 0)),
                  pl.BlockSpec((Kin, N), lambda i: (0, 0)),
                  pl.BlockSpec((1, N), lambda i: (0, 0))],
        out_specs=pl.BlockSpec((M, N), lambda i: (0, 0)),
    )(x, w, b.reshape(1, N))


# ---------------------------------------------------------------------------
# Parameters (deterministic, synthetic) — PyTorch layouts
# ---------------------------------------------------------------------------
def init_params(key, num_classes, img_size, latent_size, img_channel, dis_dim):
    H = W = img_size
    keys = jax.random.split(key, 16)

    def nrm(k, shape, scale=0.05):
        return scale * jax.random.normal(k, shape, jnp.float32)

    p = {}
    p["lin_w"] = nrm(keys[0], (latent_size, H * W))        # (in, out)
    p["lin_b"] = nrm(keys[1], (H * W,))
    p["emb"] = nrm(keys[2], (num_classes, H * W), 1.0)     # nn.Embedding table
    p["c1_w"] = nrm(keys[3], (dis_dim, img_channel + 2, 4, 4))
    p["c1_b"] = nrm(keys[4], (dis_dim,))
    p["c2_w"] = nrm(keys[5], (dis_dim * 2, dis_dim, 4, 4))
    p["g2"] = 1.0 + nrm(keys[6], (dis_dim * 2,))
    p["b2"] = nrm(keys[7], (dis_dim * 2,))
    p["c3_w"] = nrm(keys[8], (dis_dim * 4, dis_dim * 2, 4, 4))
    p["g3"] = 1.0 + nrm(keys[9], (dis_dim * 4,))
    p["b3"] = nrm(keys[10], (dis_dim * 4,))
    p["c4_w"] = nrm(keys[11], (dis_dim * 8, dis_dim * 4, 4, 4))
    p["g4"] = 1.0 + nrm(keys[12], (dis_dim * 8,))
    p["b4"] = nrm(keys[13], (dis_dim * 8,))
    p["c5_w"] = nrm(keys[14], (1, dis_dim * 8, 4, 4))
    p["c5_b"] = nrm(keys[15], (1,))
    return p


# ---------------------------------------------------------------------------
# Forward pass (mirrors Discriminator.forward)
# ---------------------------------------------------------------------------
def discriminator_forward(params, img_nchw, labels, semantic_latent, img_size, img_channel):
    B = img_nchw.shape[0]
    H = W = img_size
    C_STEM = 8                  # (img_channel + 2) = 5 padded to 8 -> K1 = 4*4*8 = 128
    NP = LANE                   # all conv output channels padded to 128 (lane-dense)

    # latent_joining: nn.Linear(latent -> H*W)
    feat = pallas_linear(semantic_latent, params["lin_w"], params["lin_b"])
    feature_plate = feat.reshape(B, H, W, 1)
    # nn.Embedding lookup (row gather kept as JAX glue)
    embedding = jnp.take(params["emb"], labels, axis=0).reshape(B, H, W, 1)
    # one-time NCHW -> NHWC of the input image; everything downstream stays NHWC
    img_nhwc = jnp.transpose(img_nchw, (0, 2, 3, 1))
    zpad = jnp.zeros((B, H, W, C_STEM - (img_channel + 2)), jnp.float32)
    p_stem = jnp.concatenate([img_nhwc, feature_plate, embedding, zpad], axis=-1)

    # b_01: Conv(k4 s2 p1) + bias + LeakyReLU(0.2)
    w1 = prep_conv_weight(params["c1_w"], C_STEM, NP)
    l01 = conv_block(p_stem, w1, (_pad_vec(params["c1_b"], NP),),
                     k=4, stride=2, pad=1, mode="bias", slope=0.2)
    # b_02..b_04: Conv(no bias) + InstanceNorm2d(affine) + LeakyReLU(0.2), fused
    w2 = prep_conv_weight(params["c2_w"], NP, NP)
    l02 = conv_block(l01, w2, (_pad_vec(params["g2"], NP), _pad_vec(params["b2"], NP)),
                     k=4, stride=2, pad=1, mode="inorm", slope=0.2)
    w3 = prep_conv_weight(params["c3_w"], NP, NP)
    l03 = conv_block(l02, w3, (_pad_vec(params["g3"], NP), _pad_vec(params["b3"], NP)),
                     k=4, stride=2, pad=1, mode="inorm", slope=0.2)
    w4 = prep_conv_weight(params["c4_w"], NP, NP)
    l04 = conv_block(l03, w4, (_pad_vec(params["g4"], NP), _pad_vec(params["b4"], NP)),
                     k=4, stride=2, pad=1, mode="inorm", slope=0.2)
    # b_05: Conv(k4 s2 p0) + bias -> (B, 1, 1, 1)
    w5 = prep_conv_weight(params["c5_w"], NP, NP)
    l05 = conv_block(l04, w5, (_pad_vec(params["c5_b"], NP),),
                     k=4, stride=2, pad=0, mode="bias", slope=None)
    # real output channel is 0; padded channels are exactly zero by construction
    return l05[..., :1].reshape(B, 1, 1, 1)


if __name__ == "__main__":
    # Small-but-consistent shapes: the final 4x4/s2/p0 conv requires img_size=64.
    B, num_classes, img_size, latent_size, img_channel, dis_dim = 2, 4, 64, 16, 3, 8

    key = jax.random.PRNGKey(0)
    k_params, k_img, k_lab, k_lat = jax.random.split(key, 4)

    params = init_params(k_params, num_classes, img_size, latent_size,
                         img_channel, dis_dim)

    img = jax.random.normal(k_img, (B, img_channel, img_size, img_size), jnp.float32)
    labels = jax.random.randint(k_lab, (B,), 0, num_classes, jnp.int32)
    semantic_latent = jax.random.normal(k_lat, (B, latent_size), jnp.float32)

    out = discriminator_forward(params, img, labels, semantic_latent,
                                img_size, img_channel)
    out = jax.block_until_ready(out)
    assert out.shape == (B, 1, 1, 1), out.shape
    print("KERNEL_OK")
</pallas_src>

<mosaic_0001>
module attributes {stable_mosaic.version = 11 : i64} {
  func.func @_linear_kernel(%arg0: i32, %arg1: memref<2x16xf32, #tpu.memory_space<vmem>>, %arg2: memref<16x4096xf32, #tpu.memory_space<vmem>>, %arg3: memref<1x4096xf32, #tpu.memory_space<vmem>>, %arg4: memref<2x4096xf32, #tpu.memory_space<vmem>>) attributes {dimension_semantics = [#tpu.dimension_semantics<arbitrary>], iteration_bounds = array<i64: 1>, scalar_prefetch = 0 : i64, scratch_operands = 0 : i64, tpu.core_type = #tpu.core_type<tc>, window_params = [{pipeline_mode = #tpu.pipeline_mode<synchronous>, transform_indices = @transform_0, window_bounds = array<i64: 2, 16>}, {pipeline_mode = #tpu.pipeline_mode<synchronous>, transform_indices = @transform_1, window_bounds = array<i64: 16, 4096>}, {pipeline_mode = #tpu.pipeline_mode<synchronous>, transform_indices = @transform_2, window_bounds = array<i64: 1, 4096>}, {pipeline_mode = #tpu.pipeline_mode<synchronous>, transform_indices = @transform_3, window_bounds = array<i64: 2, 4096>}]} {
    %c0 = arith.constant 0 : index
    %c0_0 = arith.constant 0 : index
    %0 = vector.load %arg1[%c0, %c0_0] : memref<2x16xf32, #tpu.memory_space<vmem>>, vector<2x16xf32>
    %c0_1 = arith.constant 0 : index
    %c0_2 = arith.constant 0 : index
    %1 = vector.load %arg2[%c0_1, %c0_2] : memref<16x4096xf32, #tpu.memory_space<vmem>>, vector<16x4096xf32>
    %cst = arith.constant dense<0.000000e+00> : vector<2x4096xf32>
    %2 = tpu.matmul %0, %1, %cst {dimension_numbers = #tpu.dot_dimension_numbers<[1], [0], [0], [1], [0, 0, 1, 1], [], []>} : vector<2x16xf32>, vector<16x4096xf32>, vector<2x4096xf32> -> vector<2x4096xf32>
    %c0_3 = arith.constant 0 : index
    %c0_4 = arith.constant 0 : index
    %3 = vector.load %arg3[%c0_3, %c0_4] : memref<1x4096xf32, #tpu.memory_space<vmem>>, vector<1x4096xf32>
    %4 = vector.broadcast %3 : vector<1x4096xf32> to vector<2x4096xf32>
    %5 = arith.addf %2, %4 : vector<2x4096xf32>
    %c0_5 = arith.constant 0 : index
    %c0_6 = arith.constant 0 : index
    %6 = vector.load %arg4[%c0_5, %c0_6] : memref<2x4096xf32, #tpu.memory_space<vmem>>, vector<2x4096xf32>
    tpu.vector_store %arg4[%c0_5, %c0_6], %5 {strides = array<i32>} : memref<2x4096xf32, #tpu.memory_space<vmem>>, vector<2x4096xf32>,
    return
  }
  func.func @transform_0(%arg0: i32) -> (i32, i32) {
    %c0_i32 = arith.constant 0 : i32
    %c0_i32_0 = arith.constant 0 : i32
    %c0_i32_1 = arith.constant 0 : i32
    return %c0_i32, %c0_i32_0 : i32, i32
  }
  func.func @transform_1(%arg0: i32) -> (i32, i32) {
    %c0_i32 = arith.constant 0 : i32
    %c0_i32_0 = arith.constant 0 : i32
    %c0_i32_1 = arith.constant 0 : i32
    return %c0_i32, %c0_i32_0 : i32, i32
  }
  func.func @transform_2(%arg0: i32) -> (i32, i32) {
    %c0_i32 = arith.constant 0 : i32
    %c0_i32_0 = arith.constant 0 : i32
    %c0_i32_1 = arith.constant 0 : i32
    return %c0_i32, %c0_i32_0 : i32, i32
  }
  func.func @transform_3(%arg0: i32) -> (i32, i32) {
    %c0_i32 = arith.constant 0 : i32
    %c0_i32_0 = arith.constant 0 : i32
    %c0_i32_1 = arith.constant 0 : i32
    return %c0_i32, %c0_i32_0 : i32, i32
  }
}

</mosaic_0001>

<llo_original>
// kernel: tpu_custom_call.1
$region0: #{tpu_custom_call.1}
  #allocation0 [shape = 'u32[]', space=smem, size = 0x4, offset = 0x4, fixed_abs, tag = 'smem constant byte address 0x4 - core index']
  #allocation1 [shape = 'u32[144,128]{1,0:T(1,128)}', space=vmem, size = 0x12000, scoped, tag = 'internal scratch']
  %s0 = inlined_call_operand.hbm [shape: f32[2,16], index: 0, kind: input, shape index: {}]
  %s1 = inlined_call_operand.hbm [shape: f32[16,4096], index: 1, kind: input, shape index: {}]
  %s2 = inlined_call_operand.hbm [shape: f32[1,4096], index: 2, kind: input, shape index: {}]
  %s3 = inlined_call_operand.hbm [shape: f32[2,4096], index: 3, kind: output, shape index: {}]
  %s4 = sld [smem:[#allocation0]]
  $region34: #{tpu_custom_call.1} parent=0
    _
  %s6 = ssub.s32 1, %s4
  %s7 = scalar_select 0, %s6, %s4
  $region1: #{tpu_custom_call.1} parent=0
    #allocation2 [shape = 'u8[1024]{0}', space=vmem, size = 0x400, scoped, tag = 'input window, operand 0, single buffered']
    #allocation3 [shape = 's32[1]{0}', space=sflag, size = 0x4, scoped, tag = 'scoped memory for tpu_custom_call.1']
    #allocation4 [shape = 's32[1]{0}', space=sflag, size = 0x4, scoped, tag = 'scoped memory for tpu_custom_call.1']
    #allocation5 [shape = 'u8[262144]{0}', space=vmem, size = 0x40000, scoped, tag = 'input window, operand 1, single buffered']
    #allocation6 [shape = 's32[1]{0}', space=sflag, size = 0x4, scoped, tag = 'scoped memory for tpu_custom_call.1']
    #allocation7 [shape = 'u8[16384]{0}', space=vmem, size = 0x4000, scoped, tag = 'input window, operand 2, single buffered']
    #allocation8 [shape = 'u8[32768]{0}', space=vmem, size = 0x8000, scoped, tag = 'output window, operand 0, single buffered']
    %8 = vsyncpa [#allocation3], 0
    %9 = vsyncpa [#allocation6], 0
    %10 = vsyncpa [#allocation4], 0
    // Predicated region
    $region2: #{tpu_custom_call.1} parent=1 // pred_check
      _
    $region3: #{tpu_custom_call.1} parent=1 // pred_check_branch
      %12 = sbr.rel (0) target = $region5
    $region4: #{tpu_custom_call.1} parent=1 // pred_region
      %s14 = ssub.s32 32, 32
      %15 = vsyncadd [#allocation3], %s14
      %s17 = sshll.u32 [#allocation2], 4
      %s18 = int_to_ptr.vmem [resolvable:$true] %s17
      %20 = dma.hbm_to_vmem [thread:$0]  %s0, 32, %s18, [#allocation3]
    $region5: #{tpu_custom_call.1} parent=1 // pred_fallthru
      _
    // Predicated region
    $region6: #{tpu_custom_call.1} parent=1 // pred_check
      _
    $region7: #{tpu_custom_call.1} parent=1 // pred_check_branch
      %22 = sbr.rel (0) target = $region9
    $region8: #{tpu_custom_call.1} parent=1 // pred_region
      %s24 = ssub.s32 8192, 8192
      %25 = vsyncadd [#allocation6], %s24
      %s26 = sshll.u32 [#allocation5], 4
      %s27 = int_to_ptr.vmem [resolvable:$true] %s26
      %32 = dma.hbm_to_vmem [thread:$0]  %s1, 8192, %s27, [#allocation6], 4096, 4096, 256
    $region9: #{tpu_custom_call.1} parent=1 // pred_fallthru
      _
    // Predicated region
    $region10: #{tpu_custom_call.1} parent=1 // pred_check
      _
    $region11: #{tpu_custom_call.1} parent=1 // pred_check_branch
      %34 = sbr.rel (0) target = $region13
    $region12: #{tpu_custom_call.1} parent=1 // pred_region
      %s36 = ssub.s32 512, 512
      %37 = vsyncadd [#allocation6], %s36
      %s39 = sshll.u32 [#allocation7], 4
      %s40 = int_to_ptr.vmem [resolvable:$true] %s39
      %42 = dma.hbm_to_vmem [thread:$0]  %s2, 512, %s40, [#allocation6]
    $region13: #{tpu_custom_call.1} parent=1 // pred_fallthru
      _
    // Predicated region
    $region14: #{tpu_custom_call.1} parent=1 // pred_check
      _
    $region15: #{tpu_custom_call.1} parent=1 // pred_check_branch
      %44 = sbr.rel (0) target = $region17
    $region16: #{tpu_custom_call.1} parent=1 // pred_region
      %45 = dma.done [#allocation3], 32
    $region17: #{tpu_custom_call.1} parent=1 // pred_fallthru
      _
    // Predicated region
    $region18: #{tpu_custom_call.1} parent=1 // pred_check
      _
    $region19: #{tpu_custom_call.1} parent=1 // pred_check_branch
      %47 = sbr.rel (0) target = $region21
    $region20: #{tpu_custom_call.1} parent=1 // pred_region
      %48 = dma.done [#allocation6], 8192
    $region21: #{tpu_custom_call.1} parent=1 // pred_fallthru
      _
    // Predicated region
    $region22: #{tpu_custom_call.1} parent=1 // pred_check
      _
    $region23: #{tpu_custom_call.1} parent=1 // pred_check_branch
      %50 = sbr.rel (0) target = $region25
    $region24: #{tpu_custom_call.1} parent=1 // pred_region
      %51 = dma.done [#allocation6], 512
    $region25: #{tpu_custom_call.1} parent=1 // pred_fallthru
      _
    %v52 = vld [vmem:[#allocation2] sm:$0x3]
    %v53 = vld [vmem:[#allocation5] sm:$0xff]
    %v54 = vld [vmem:[#allocation5 + $0x8] sm:$0xff]
    %v55 = vld [vmem:[#allocation5 + $0x10] sm:$0xff]
    %v56 = vld [vmem:[#allocation5 + $0x18] sm:$0xff]
    %v57 = vld [vmem:[#allocation5 + $0x20] sm:$0xff]
    %v58 = vld [vmem:[#allocation5 + $0x28] sm:$0xff]
    %v59 = vld [vmem:[#allocation5 + $0x30] sm:$0xff]
    %v60 = vld [vmem:[#allocation5 + $0x38] sm:$0xff]
    %v61 = vld [vmem:[#allocation5 + $0x40] sm:$0xff]
    %v62 = vld [vmem:[#allocation5 + $0x48] sm:$0xff]
    %v63 = vld [vmem:[#allocation5 + $0x50] sm:$0xff]
    %v64 = vld [vmem:[#allocation5 + $0x58] sm:$0xff]
    %v65 = vld [vmem:[#allocation5 + $0x60] sm:$0xff]
    %v66 = vld [vmem:[#allocation5 + $0x68] sm:$0xff]
    %v67 = vld [vmem:[#allocation5 + $0x70] sm:$0xff]
    %v68 = vld [vmem:[#allocation5 + $0x78] sm:$0xff]
    %v69 = vld [vmem:[#allocation5 + $0x80] sm:$0xff]
    %v70 = vld [vmem:[#allocation5 + $0x88] sm:$0xff]
    %v71 = vld [vmem:[#allocation5 + $0x90] sm:$0xff]
    %v72 = vld [vmem:[#allocation5 + $0x98] sm:$0xff]
    %v73 = vld [vmem:[#allocation5 + $0xa0] sm:$0xff]
    %v74 = vld [vmem:[#allocation5 + $0xa8] sm:$0xff]
    %v75 = vld [vmem:[#allocation5 + $0xb0] sm:$0xff]
    %v76 = vld [vmem:[#allocation5 + $0xb8] sm:$0xff]
    %v77 = vld [vmem:[#allocation5 + $0xc0] sm:$0xff]
    %v78 = vld [vmem:[#allocation5 + $0xc8] sm:$0xff]
    %v79 = vld [vmem:[#allocation5 + $0xd0] sm:$0xff]
    %v80 = vld [vmem:[#allocation5 + $0xd8] sm:$0xff]
    %v81 = vld [vmem:[#allocation5 + $0xe0] sm:$0xff]
    %v82 = vld [vmem:[#allocation5 + $0xe8] sm:$0xff]
    %v83 = vld [vmem:[#allocation5 + $0xf0] sm:$0xff]
    %v84 = vld [vmem:[#allocation5 + $0xf8] sm:$0xff]
    %v85 = vld [vmem:[#allocation5 + $0x100] sm:$0xff]
    %v86 = vld [vmem:[#allocation5 + $0x108] sm:$0xff]
    %v87 = vld [vmem:[#allocation5 + $0x110] sm:$0xff]
    %v88 = vld [vmem:[#allocation5 + $0x118] sm:$0xff]
    %v89 = vld [vmem:[#allocation5 + $0x120] sm:$0xff]
    %v90 = vld [vmem:[#allocation5 + $0x128] sm:$0xff]
    %v91 = vld [vmem:[#allocation5 + $0x130] sm:$0xff]
    %v92 = vld [vmem:[#allocation5 + $0x138] sm:$0xff]
    %v93 = vld [vmem:[#allocation5 + $0x140] sm:$0xff]
    %v94 = vld [vmem:[#allocation5 + $0x148] sm:$0xff]
    %v95 = vld [vmem:[#allocation5 + $0x150] sm:$0xff]
    %v96 = vld [vmem:[#allocation5 + $0x158] sm:$0xff]
    %v97 = vld [vmem:[#allocation5 + $0x160] sm:$0xff]
    %v98 = vld [vmem:[#allocation5 + $0x168] sm:$0xff]
    %v99 = vld [vmem:[#allocation5 + $0x170] sm:$0xff]
    %v100 = vld [vmem:[#allocation5 + $0x178] sm:$0xff]
    %v101 = vld [vmem:[#allocation5 + $0x180] sm:$0xff]
    %v102 = vld [vmem:[#allocation5 + $0x188] sm:$0xff]
    %v103 = vld [vmem:[#allocation5 + $0x190] sm:$0xff]
    %v104 = vld [vmem:[#allocation5 + $0x198] sm:$0xff]
    %v105 = vld [vmem:[#allocation5 + $0x1a0] sm:$0xff]
    %v106 = vld [vmem:[#allocation5 + $0x1a8] sm:$0xff]
    %v107 = vld [vmem:[#allocation5 + $0x1b0] sm:$0xff]
    %v108 = vld [vmem:[#allocation5 + $0x1b8] sm:$0xff]
    %v109 = vld [vmem:[#allocation5 + $0x1c0] sm:$0xff]
    %v110 = vld [vmem:[#allocation5 + $0x1c8] sm:$0xff]
    %v111 = vld [vmem:[#allocation5 + $0x1d0] sm:$0xff]
    %v112 = vld [vmem:[#allocation5 + $0x1d8] sm:$0xff]
    %v113 = vld [vmem:[#allocation5 + $0x1e0] sm:$0xff]
    %v114 = vld [vmem:[#allocation5 + $0x1e8] sm:$0xff]
    %v115 = vld [vmem:[#allocation5 + $0x1f0] sm:$0xff]
    %v116 = vld [vmem:[#allocation5 + $0x1f8] sm:$0xff]
    %v117 = vld [vmem:[#allocation7] sm:$0xff]
    %v118 = vld [vmem:[#allocation7 + $0x8] sm:$0xff]
    %v119 = vld [vmem:[#allocation7 + $0x10] sm:$0xff]
    %v120 = vld [vmem:[#allocation7 + $0x18] sm:$0xff]
    %v125 = vlaneseq
    %v126 = vshrl.u32 %v125, 7
    %v127 = vsub.s32 0, %v126
    %v128 = vrot.slane %v117, %v127
    %v129 = vlaneseq
    %v130 = vshrl.u32 %v129, 7
    %v131 = vsub.s32 1, %v130
    %v132 = vrot.slane %v117, %v131
    %v133 = vlaneseq
    %v134 = vshrl.u32 %v133, 7
    %v135 = vsub.s32 2, %v134
    %v136 = vrot.slane %v117, %v135
    %v137 = vlaneseq
    %v138 = vshrl.u32 %v137, 7
    %v139 = vsub.s32 3, %v138
    %v140 = vrot.slane %v117, %v139
    %v141 = vlaneseq
    %v142 = vshrl.u32 %v141, 7
    %v143 = vsub.s32 4, %v142
    %v144 = vrot.slane %v117, %v143
    %v145 = vlaneseq
    %v146 = vshrl.u32 %v145, 7
    %v147 = vsub.s32 5, %v146
    %v148 = vrot.slane %v117, %v147
    %v149 = vlaneseq
    %v150 = vshrl.u32 %v149, 7
    %v151 = vsub.s32 6, %v150
    %v152 = vrot.slane %v117, %v151
    %v153 = vlaneseq
    %v154 = vshrl.u32 %v153, 7
    %v155 = vsub.s32 7, %v154
    %v156 = vrot.slane %v117, %v155
    %v157 = vlaneseq
    %v158 = vshrl.u32 %v157, 7
    %v159 = vsub.s32 0, %v158
    %v160 = vrot.slane %v118, %v159
    %v161 = vlaneseq
    %v162 = vshrl.u32 %v161, 7
    %v163 = vsub.s32 1, %v162
    %v164 = vrot.slane %v118, %v163
    %v165 = vlaneseq
    %v166 = vshrl.u32 %v165, 7
    %v167 = vsub.s32 2, %v166
    %v168 = vrot.slane %v118, %v167
    %v169 = vlaneseq
    %v170 = vshrl.u32 %v169, 7
    %v171 = vsub.s32 3, %v170
    %v172 = vrot.slane %v118, %v171
    %v173 = vlaneseq
    %v174 = vshrl.u32 %v173, 7
    %v175 = vsub.s32 4, %v174
    %v176 = vrot.slane %v118, %v175
    %v177 = vlaneseq
    %v178 = vshrl.u32 %v177, 7
    %v179 = vsub.s32 5, %v178
    %v180 = vrot.slane %v118, %v179
    %v181 = vlaneseq
    %v182 = vshrl.u32 %v181, 7
    %v183 = vsub.s32 6, %v182
    %v184 = vrot.slane %v118, %v183
    %v185 = vlaneseq
    %v186 = vshrl.u32 %v185, 7
    %v187 = vsub.s32 7, %v186
    %v188 = vrot.slane %v118, %v187
    %v189 = vlaneseq
    %v190 = vshrl.u32 %v189, 7
    %v191 = vsub.s32 0, %v190
    %v192 = vrot.slane %v119, %v191
    %v193 = vlaneseq
    %v194 = vshrl.u32 %v193, 7
    %v195 = vsub.s32 1, %v194
    %v196 = vrot.slane %v119, %v195
    %v197 = vlaneseq
    %v198 = vshrl.u32 %v197, 7
    %v199 = vsub.s32 2, %v198
    %v200 = vrot.slane %v119, %v199
    %v201 = vlaneseq
    %v202 = vshrl.u32 %v201, 7
    %v203 = vsub.s32 3, %v202
    %v204 = vrot.slane %v119, %v203
    %v205 = vlaneseq
    %v206 = vshrl.u32 %v205, 7
    %v207 = vsub.s32 4, %v206
    %v208 = vrot.slane %v119, %v207
    %v209 = vlaneseq
    %v210 = vshrl.u32 %v209, 7
    %v211 = vsub.s32 5, %v210
    %v212 = vrot.slane %v119, %v211
    %v213 = vlaneseq
    %v214 = vshrl.u32 %v213, 7
    %v215 = vsub.s32 6, %v214
    %v216 = vrot.slane %v119, %v215
    %v217 = vlaneseq
    %v218 = vshrl.u32 %v217, 7
    %v219 = vsub.s32 7, %v218
    %v220 = vrot.slane %v119, %v219
    %v221 = vlaneseq
    %v222 = vshrl.u32 %v221, 7
    %v223 = vsub.s32 0, %v222
    %v224 = vrot.slane %v120, %v223
    %v225 = vlaneseq
    %v226 = vshrl.u32 %v225, 7
    %v227 = vsub.s32 1, %v226
    %v228 = vrot.slane %v120, %v227
    %v229 = vlaneseq
    %v230 = vshrl.u32 %v229, 7
    %v231 = vsub.s32 2, %v230
    %v232 = vrot.slane %v120, %v231
    %v233 = vlaneseq
    %v234 = vshrl.u32 %v233, 7
    %v235 = vsub.s32 3, %v234
    %v236 = vrot.slane %v120, %v235
    %v237 = vlaneseq
    %v238 = vshrl.u32 %v237, 7
    %v239 = vsub.s32 4, %v238
    %v240 = vrot.slane %v120, %v239
    %v241 = vlaneseq
    %v242 = vshrl.u32 %v241, 7
    %v243 = vsub.s32 5, %v242
    %v244 = vrot.slane %v120, %v243
    %v245 = vlaneseq
    %v246 = vshrl.u32 %v245, 7
    %v247 = vsub.s32 6, %v246
    %v248 = vrot.slane %v120, %v247
    %v249 = vlaneseq
    %v250 = vshrl.u32 %v249, 7
    %v251 = vsub.s32 7, %v250
    %v252 = vrot.slane %v120, %v251
    %vm285 = vcmask 130048
    %v287 = vsel %vm285, %v52, 0
    %289 = vmatprep.subr.mxu0 %v54
    %290 = vmatpush1.msra.mxu0 %v53
    %291 = vmatprep.subr.mxu0 %v86
    %292 = vmatpush1.msra.mxu0 %v85
    %293 = vmatprep.subr.mxu0 0.0
    %294 = vmatpush1.msra.mxu0 0.0
    %295 = vmatprep.subr.mxu0 0.0
    %296 = vmatpush1.msra.mxu0 0.0
    %297 = vmatprep.subr.mxu0 0.0
    %298 = vmatpush1.msra.mxu0 0.0
    %299 = vmatprep.subr.mxu0 0.0
    %300 = vmatpush1.msra.mxu0 0.0
    %301 = vmatprep.subr.mxu0 0.0
    %302 = vmatpush1.msra.mxu0 0.0
    %303 = vmatprep.subr.mxu0 0.0
    %304 = vmatpush1.msra.mxu0 0.0
    %305 = vmatprep.subr.mxu0 0.0
    %306 = vmatpush1.msra.mxu0 0.0
    %307 = vmatprep.subr.mxu0 0.0
    %308 = vmatpush1.msra.mxu0 0.0
    %309 = vmatprep.subr.mxu0 0.0
    %310 = vmatpush1.msra.mxu0 0.0
    %311 = vmatprep.subr.mxu0 0.0
    %312 = vmatpush1.msra.mxu0 0.0
    %313 = vmatprep.subr.mxu0 0.0
    %314 = vmatpush1.msra.mxu0 0.0
    %315 = vmatprep.subr.mxu0 0.0
    %316 = vmatpush1.msra.mxu0 0.0
    %317 = vmatprep.subr.mxu0 0.0
    %318 = vmatpush1.msra.mxu0 0.0
    %319 = vmatprep.subr.mxu0 0.0
    %320 = vmatpush1.msra.mxu0 0.0
    %321 = vmatprep.subr.mxu0 0.0
    %322 = vmatpush1.msra.mxu0 0.0
    %323 = vmatprep.subr.mxu0 0.0
    %324 = vmatpush1.msra.mxu0 0.0
    %325 = vmatprep.subr.mxu0 0.0
    %326 = vmatpush1.msra.mxu0 0.0
    %327 = vmatprep.subr.mxu0 0.0
    %328 = vmatpush1.msra.mxu0 0.0
    %329 = vmatprep.subr.mxu0 0.0
    %330 = vmatpush1.msra.mxu0 0.0
    %331 = vmatprep.subr.mxu0 0.0
    %332 = vmatpush1.msra.mxu0 0.0
    %333 = vmatprep.subr.mxu0 0.0
    %334 = vmatpush1.msra.mxu0 0.0
    %335 = vmatprep.subr.mxu0 0.0
    %336 = vmatpush1.msra.mxu0 0.0
    %337 = vmatprep.subr.mxu0 0.0
    %338 = vmatpush1.msra.mxu0 0.0
    %339 = vmatprep.subr.mxu0 0.0
    %340 = vmatpush1.msra.mxu0 0.0
    %341 = vmatprep.subr.mxu0 0.0
    %342 = vmatpush1.msra.mxu0 0.0
    %343 = vmatprep.subr.mxu0 0.0
    %344 = vmatpush1.msra.mxu0 0.0
    %345 = vmatprep.subr.mxu0 0.0
    %346 = vmatpush1.msra.mxu0 0.0
    %347 = vmatprep.subr.mxu0 0.0
    %348 = vmatpush1.msra.mxu0 0.0
    %349 = vmatprep.subr.mxu0 0.0
    %350 = vmatpush1.msra.mxu0 0.0
    %351 = vmatprep.subr.mxu0 0.0
    %352 = vmatpush1.msra.mxu0 0.0
    %353 = vmatprep.mubr.f32.mxu0 0.0
    %354 = vmatmul.mubr.f32.gmra.mrb[0].mxu0 %v287
    %v355 = vpop.f32.mrb[0].mxu0
    %v356 = vadd.f32 %v128, %v355
    %v357 = vpop.f32.mrb[0].mxu0
    %v358 = vadd.f32 %v132, %v357
    %359 = vdwg.mxu0
    %360 = vmatprep.subr.mxu0 %v56
    %361 = vmatpush1.msra.mxu0 %v55
    %362 = vmatprep.subr.mxu0 %v88
    %363 = vmatpush1.msra.mxu0 %v87
    %364 = vmatprep.subr.mxu0 0.0
    %365 = vmatpush1.msra.mxu0 0.0
    %366 = vmatprep.subr.mxu0 0.0
    %367 = vmatpush1.msra.mxu0 0.0
    %368 = vmatprep.subr.mxu0 0.0
    %369 = vmatpush1.msra.mxu0 0.0
    %370 = vmatprep.subr.mxu0 0.0
    %371 = vmatpush1.msra.mxu0 0.0
    %372 = vmatprep.subr.mxu0 0.0
    %373 = vmatpush1.msra.mxu0 0.0
    %374 = vmatprep.subr.mxu0 0.0
    %375 = vmatpush1.msra.mxu0 0.0
    %376 = vmatprep.subr.mxu0 0.0
    %377 = vmatpush1.msra.mxu0 0.0
    %378 = vmatprep.subr.mxu0 0.0
    %379 = vmatpush1.msra.mxu0 0.0
    %380 = vmatprep.subr.mxu0 0.0
    %381 = vmatpush1.msra.mxu0 0.0
    %382 = vmatprep.subr.mxu0 0.0
    %383 = vmatpush1.msra.mxu0 0.0
    %384 = vmatprep.subr.mxu0 0.0
    %385 = vmatpush1.msra.mxu0 0.0
    %386 = vmatprep.subr.mxu0 0.0
    %387 = vmatpush1.msra.mxu0 0.0
    %388 = vmatprep.subr.mxu0 0.0
    %389 = vmatpush1.msra.mxu0 0.0
    %390 = vmatprep.subr.mxu0 0.0
    %391 = vmatpush1.msra.mxu0 0.0
    %392 = vmatprep.subr.mxu0 0.0
    %393 = vmatpush1.msra.mxu0 0.0
    %394 = vmatprep.subr.mxu0 0.0
    %395 = vmatpush1.msra.mxu0 0.0
    %396 = vmatprep.subr.mxu0 0.0
    %397 = vmatpush1.msra.mxu0 0.0
    %398 = vmatprep.subr.mxu0 0.0
    %399 = vmatpush1.msra.mxu0 0.0
    %400 = vmatprep.subr.mxu0 0.0
    %401 = vmatpush1.msra.mxu0 0.0
    %402 = vmatprep.subr.mxu0 0.0
    %403 = vmatpush1.msra.mxu0 0.0
    %404 = vmatprep.subr.mxu0 0.0
    %405 = vmatpush1.msra.mxu0 0.0
    %406 = vmatprep.subr.mxu0 0.0
    %407 = vmatpush1.msra.mxu0 0.0
    %408 = vmatprep.subr.mxu0 0.0
    %409 = vmatpush1.msra.mxu0 0.0
    %410 = vmatprep.subr.mxu0 0.0
    %411 = vmatpush1.msra.mxu0 0.0
    %412 = vmatprep.subr.mxu0 0.0
    %413 = vmatpush1.msra.mxu0 0.0
    %414 = vmatprep.subr.mxu0 0.0
    %415 = vmatpush1.msra.mxu0 0.0
    %416 = vmatprep.subr.mxu0 0.0
    %417 = vmatpush1.msra.mxu0 0.0
    %418 = vmatprep.subr.mxu0 0.0
    %419 = vmatpush1.msra.mxu0 0.0
    %420 = vmatprep.subr.mxu0 0.0
    %421 = vmatpush1.msra.mxu0 0.0
    %422 = vmatprep.subr.mxu0 0.0
    %423 = vmatpush1.msra.mxu0 0.0
    %424 = vmatprep.mubr.f32.mxu0 0.0
    %425 = vmatmul.mubr.f32.gmra.mrb[0].mxu0 %v287
    %v426 = vpop.f32.mrb[0].mxu0
    %v427 = vadd.f32 %v136, %v426
    %v428 = vpop.f32.mrb[0].mxu0
    %v429 = vadd.f32 %v140, %v428
    %430 = vdwg.mxu0
    %431 = vmatprep.subr.mxu0 %v58
    %432 = vmatpush1.msra.mxu0 %v57
    %433 = vmatprep.subr.mxu0 %v90
    %434 = vmatpush1.msra.mxu0 %v89
    %435 = vmatprep.subr.mxu0 0.0
    %436 = vmatpush1.msra.mxu0 0.0
    %437 = vmatprep.subr.mxu0 0.0
    %438 = vmatpush1.msra.mxu0 0.0
    %439 = vmatprep.subr.mxu0 0.0
    %440 = vmatpush1.msra.mxu0 0.0
    %441 = vmatprep.subr.mxu0 0.0
    %442 = vmatpush1.msra.mxu0 0.0
    %443 = vmatprep.subr.mxu0 0.0
    %444 = vmatpush1.msra.mxu0 0.0
    %445 = vmatprep.subr.mxu0 0.0
    %446 = vmatpush1.msra.mxu0 0.0
    %447 = vmatprep.subr.mxu0 0.0
    %448 = vmatpush1.msra.mxu0 0.0
    %449 = vmatprep.subr.mxu0 0.0
    %450 = vmatpush1.msra.mxu0 0.0
    %451 = vmatprep.subr.mxu0 0.0
    %452 = vmatpush1.msra.mxu0 0.0
    %453 = vmatprep.subr.mxu0 0.0
    %454 = vmatpush1.msra.mxu0 0.0
    %455 = vmatprep.subr.mxu0 0.0
    %456 = vmatpush1.msra.mxu0 0.0
    %457 = vmatprep.subr.mxu0 0.0
    %458 = vmatpush1.msra.mxu0 0.0
    %459 = vmatprep.subr.mxu0 0.0
    %460 = vmatpush1.msra.mxu0 0.0
    %461 = vmatprep.subr.mxu0 0.0
    %462 = vmatpush1.msra.mxu0 0.0
    %463 = vmatprep.subr.mxu0 0.0
    %464 = vmatpush1.msra.mxu0 0.0
    %465 = vmatprep.subr.mxu0 0.0
    %466 = vmatpush1.msra.mxu0 0.0
    %467 = vmatprep.subr.mxu0 0.0
    %468 = vmatpush1.msra.mxu0 0.0
    %469 = vmatprep.subr.mxu0 0.0
    %470 = vmatpush1.msra.mxu0 0.0
    %471 = vmatprep.subr.mxu0 0.0
    %472 = vmatpush1.msra.mxu0 0.0
    %473 = vmatprep.subr.mxu0 0.0
    %474 = vmatpush1.msra.mxu0 0.0
    %475 = vmatprep.subr.mxu0 0.0
    %476 = vmatpush1.msra.mxu0 0.0
    %477 = vmatprep.subr.mxu0 0.0
    %478 = vmatpush1.msra.mxu0 0.0
    %479 = vmatprep.subr.mxu0 0.0
    %480 = vmatpush1.msra.mxu0 0.0
    %481 = vmatprep.subr.mxu0 0.0
    %482 = vmatpush1.msra.mxu0 0.0
    %483 = vmatprep.subr.mxu0 0.0
    %484 = vmatpush1.msra.mxu0 0.0
    %485 = vmatprep.subr.mxu0 0.0
    %486 = vmatpush1.msra.mxu0 0.0
    %487 = vmatprep.subr.mxu0 0.0
    %488 = vmatpush1.msra.mxu0 0.0
    %489 = vmatprep.subr.mxu0 0.0
    %490 = vmatpush1.msra.mxu0 0.0
    %491 = vmatprep.subr.mxu0 0.0
    %492 = vmatpush1.msra.mxu0 0.0
    %493 = vmatprep.subr.mxu0 0.0
    %494 = vmatpush1.msra.mxu0 0.0
    %495 = vmatprep.mubr.f32.mxu0 0.0
    %496 = vmatmul.mubr.f32.gmra.mrb[0].mxu0 %v287
    %v497 = vpop.f32.mrb[0].mxu0
    %v498 = vadd.f32 %v144, %v497
    %v499 = vpop.f32.mrb[0].mxu0
    %v500 = vadd.f32 %v148, %v499
    %501 = vdwg.mxu0
    %502 = vmatprep.subr.mxu0 %v60
    %503 = vmatpush1.msra.mxu0 %v59
    %504 = vmatprep.subr.mxu0 %v92
    %505 = vmatpush1.msra.mxu0 %v91
    %506 = vmatprep.subr.mxu0 0.0
    %507 = vmatpush1.msra.mxu0 0.0
    %508 = vmatprep.subr.mxu0 0.0
    %509 = vmatpush1.msra.mxu0 0.0
    %510 = vmatprep.subr.mxu0 0.0
    %511 = vmatpush1.msra.mxu0 0.0
    %512 = vmatprep.subr.mxu0 0.0
    %513 = vmatpush1.msra.mxu0 0.0
    %514 = vmatprep.subr.mxu0 0.0
    %515 = vmatpush1.msra.mxu0 0.0
    %516 = vmatprep.subr.mxu0 0.0
    %517 = vmatpush1.msra.mxu0 0.0
    %518 = vmatprep.subr.mxu0 0.0
    %519 = vmatpush1.msra.mxu0 0.0
    %520 = vmatprep.subr.mxu0 0.0
    %521 = vmatpush1.msra.mxu0 0.0
    %522 = vmatprep.subr.mxu0 0.0
    %523 = vmatpush1.msra.mxu0 0.0
    %524 = vmatprep.subr.mxu0 0.0
    %525 = vmatpush1.msra.mxu0 0.0
    %526 = vmatprep.subr.mxu0 0.0
    %527 = vmatpush1.msra.mxu0 0.0
    %528 = vmatprep.subr.mxu0 0.0
    %529 = vmatpush1.msra.mxu0 0.0
    %530 = vmatprep.subr.mxu0 0.0
    %531 = vmatpush1.msra.mxu0 0.0
    %532 = vmatprep.subr.mxu0 0.0
    %533 = vmatpush1.msra.mxu0 0.0
    %534 = vmatprep.subr.mxu0 0.0
    %535 = vmatpush1.msra.mxu0 0.0
    %536 = vmatprep.subr.mxu0 0.0
    %537 = vmatpush1.msra.mxu0 0.0
    %538 = vmatprep.subr.mxu0 0.0
    %539 = vmatpush1.msra.mxu0 0.0
    %540 = vmatprep.subr.mxu0 0.0
    %541 = vmatpush1.msra.mxu0 0.0
    %542 = vmatprep.subr.mxu0 0.0
    %543 = vmatpush1.msra.mxu0 0.0
    %544 = vmatprep.subr.mxu0 0.0
    %545 = vmatpush1.msra.mxu0 0.0
    %546 = vmatprep.subr.mxu0 0.0
    %547 = vmatpush1.msra.mxu0 0.0
    %548 = vmatprep.subr.mxu0 0.0
    %549 = vmatpush1.msra.mxu0 0.0
    %550 = vmatprep.subr.mxu0 0.0
    %551 = vmatpush1.msra.mxu0 0.0
    %552 = vmatprep.subr.mxu0 0.0
    %553 = vmatpush1.msra.mxu0 0.0
    %554 = vmatprep.subr.mxu0 0.0
    %555 = vmatpush1.msra.mxu0 0.0
    %556 = vmatprep.subr.mxu0 0.0
    %557 = vmatpush1.msra.mxu0 0.0
    %558 = vmatprep.subr.mxu0 0.0
    %559 = vmatpush1.msra.mxu0 0.0
    %560 = vmatprep.subr.mxu0 0.0
    %561 = vmatpush1.msra.mxu0 0.0
    %562 = vmatprep.subr.mxu0 0.0
    %563 = vmatpush1.msra.mxu0 0.0
    %564 = vmatprep.subr.mxu0 0.0
    %565 = vmatpush1.msra.mxu0 0.0
    %566 = vmatprep.mubr.f32.mxu0 0.0
    %567 = vmatmul.mubr.f32.gmra.mrb[0].mxu0 %v287
    %v568 = vpop.f32.mrb[0].mxu0
    %v569 = vadd.f32 %v152, %v568
    %v570 = vpop.f32.mrb[0].mxu0
    %v571 = vadd.f32 %v156, %v570
    %572 = vdwg.mxu0
    %573 = vmatprep.subr.mxu0 %v62
    %574 = vmatpush1.msra.mxu0 %v61
    %575 = vmatprep.subr.mxu0 %v94
    %576 = vmatpush1.msra.mxu0 %v93
    %577 = vmatprep.subr.mxu0 0.0
    %578 = vmatpush1.msra.mxu0 0.0
    %579 = vmatprep.subr.mxu0 0.0
    %580 = vmatpush1.msra.mxu0 0.0
    %581 = vmatprep.subr.mxu0 0.0
    %582 = vmatpush1.msra.mxu0 0.0
    %583 = vmatprep.subr.mxu0 0.0
    %584 = vmatpush1.msra.mxu0 0.0
    %585 = vmatprep.subr.mxu0 0.0
    %586 = vmatpush1.msra.mxu0 0.0
    %587 = vmatprep.subr.mxu0 0.0
    %588 = vmatpush1.msra.mxu0 0.0
    %589 = vmatprep.subr.mxu0 0.0
    %590 = vmatpush1.msra.mxu0 0.0
    %591 = vmatprep.subr.mxu0 0.0
    %592 = vmatpush1.msra.mxu0 0.0
    %593 = vmatprep.subr.mxu0 0.0
    %594 = vmatpush1.msra.mxu0 0.0
    %595 = vmatprep.subr.mxu0 0.0
    %596 = vmatpush1.msra.mxu0 0.0
    %597 = vmatprep.subr.mxu0 0.0
    %598 = vmatpush1.msra.mxu0 0.0
    %599 = vmatprep.subr.mxu0 0.0
    %600 = vmatpush1.msra.mxu0 0.0
    %601 = vmatprep.subr.mxu0 0.0
    %602 = vmatpush1.msra.mxu0 0.0
    %603 = vmatprep.subr.mxu0 0.0
    %604 = vmatpush1.msra.mxu0 0.0
    %605 = vmatprep.subr.mxu0 0.0
    %606 = vmatpush1.msra.mxu0 0.0
    %607 = vmatprep.subr.mxu0 0.0
    %608 = vmatpush1.msra.mxu0 0.0
    %609 = vmatprep.subr.mxu0 0.0
    %610 = vmatpush1.msra.mxu0 0.0
    %611 = vmatprep.subr.mxu0 0.0
    %612 = vmatpush1.msra.mxu0 0.0
    %613 = vmatprep.subr.mxu0 0.0
    %614 = vmatpush1.msra.mxu0 0.0
    %615 = vmatprep.subr.mxu0 0.0
    %616 = vmatpush1.msra.mxu0 0.0
    %617 = vmatprep.subr.mxu0 0.0
    %618 = vmatpush1.msra.mxu0 0.0
    %619 = vmatprep.subr.mxu0 0.0
    %620 = vmatpush1.msra.mxu0 0.0
    %621 = vmatprep.subr.mxu0 0.0
    %622 = vmatpush1.msra.mxu0 0.0
    %623 = vmatprep.subr.mxu0 0.0
    %624 = vmatpush1.msra.mxu0 0.0
    %625 = vmatprep.subr.mxu0 0.0
    %626 = vmatpush1.msra.mxu0 0.0
    %627 = vmatprep.subr.mxu0 0.0
    %628 = vmatpush1.msra.mxu0 0.0
    %629 = vmatprep.subr.mxu0 0.0
    %630 = vmatpush1.msra.mxu0 0.0
    %631 = vmatprep.subr.mxu0 0.0
    %632 = vmatpush1.msra.mxu0 0.0
    %633 = vmatprep.subr.mxu0 0.0
    %634 = vmatpush1.msra.mxu0 0.0
    %635 = vmatprep.subr.mxu0 0.0
    %636 = vmatpush1.msra.mxu0 0.0
    %637 = vmatprep.mubr.f32.mxu0 0.0
    %638 = vmatmul.mubr.f32.gmra.mrb[0].mxu0 %v287
    %v639 = vpop.f32.mrb[0].mxu0
    %v640 = vadd.f32 %v160, %v639
    %v641 = vpop.f32.mrb[0].mxu0
    %v642 = vadd.f32 %v164, %v641
    %643 = vdwg.mxu0
    %644 = vmatprep.subr.mxu0 %v64
    %645 = vmatpush1.msra.mxu0 %v63
    %646 = vmatprep.subr.mxu0 %v96
    %647 = vmatpush1.msra.mxu0 %v95
    %648 = vmatprep.subr.mxu0 0.0
    %649 = vmatpush1.msra.mxu0 0.0
    %650 = vmatprep.subr.mxu0 0.0
    %651 = vmatpush1.msra.mxu0 0.0
    %652 = vmatprep.subr.mxu0 0.0
    %653 = vmatpush1.msra.mxu0 0.0
    %654 = vmatprep.subr.mxu0 0.0
    %655 = vmatpush1.msra.mxu0 0.0
    %656 = vmatprep.subr.mxu0 0.0
    %657 = vmatpush1.msra.mxu0 0.0
    %658 = vmatprep.subr.mxu0 0.0
    %659 = vmatpush1.msra.mxu0 0.0
    %660 = vmatprep.subr.mxu0 0.0
    %661 = vmatpush1.msra.mxu0 0.0
    %662 = vmatprep.subr.mxu0 0.0
    %663 = vmatpush1.msra.mxu0 0.0
    %664 = vmatprep.subr.mxu0 0.0
    %665 = vmatpush1.msra.mxu0 0.0
    %666 = vmatprep.subr.mxu0 0.0
    %667 = vmatpush1.msra.mxu0 0.0
    %668 = vmatprep.subr.mxu0 0.0
    %669 = vmatpush1.msra.mxu0 0.0
    %670 = vmatprep.subr.mxu0 0.0
    %671 = vmatpush1.msra.mxu0 0.0
    %672 = vmatprep.subr.mxu0 0.0
    %673 = vmatpush1.msra.mxu0 0.0
    %674 = vmatprep.subr.mxu0 0.0
    %675 = vmatpush1.msra.mxu0 0.0
    %676 = vmatprep.subr.mxu0 0.0
    %677 = vmatpush1.msra.mxu0 0.0
    %678 = vmatprep.subr.mxu0 0.0
    %679 = vmatpush1.msra.mxu0 0.0
    %680 = vmatprep.subr.mxu0 0.0
    %681 = vmatpush1.msra.mxu0 0.0
    %682 = vmatprep.subr.mxu0 0.0
    %683 = vmatpush1.msra.mxu0 0.0
    %684 = vmatprep.subr.mxu0 0.0
    %685 = vmatpush1.msra.mxu0 0.0
    %686 = vmatprep.subr.mxu0 0.0
    %687 = vmatpush1.msra.mxu0 0.0
    %688 = vmatprep.subr.mxu0 0.0
    %689 = vmatpush1.msra.mxu0 0.0
    %690 = vmatprep.subr.mxu0 0.0
    %691 = vmatpush1.msra.mxu0 0.0
    %692 = vmatprep.subr.mxu0 0.0
    %693 = vmatpush1.msra.mxu0 0.0
    %694 = vmatprep.subr.mxu0 0.0
    %695 = vmatpush1.msra.mxu0 0.0
    %696 = vmatprep.subr.mxu0 0.0
    %697 = vmatpush1.msra.mxu0 0.0
    %698 = vmatprep.subr.mxu0 0.0
    %699 = vmatpush1.msra.mxu0 0.0
    %700 = vmatprep.subr.mxu0 0.0
    %701 = vmatpush1.msra.mxu0 0.0
    %702 = vmatprep.subr.mxu0 0.0
    %703 = vmatpush1.msra.mxu0 0.0
    %704 = vmatprep.subr.mxu0 0.0
    %705 = vmatpush1.msra.mxu0 0.0
    %706 = vmatprep.subr.mxu0 0.0
    %707 = vmatpush1.msra.mxu0 0.0
    %708 = vmatprep.mubr.f32.mxu0 0.0
    %709 = vmatmul.mubr.f32.gmra.mrb[0].mxu0 %v287
    %v710 = vpop.f32.mrb[0].mxu0
    %v711 = vadd.f32 %v168, %v710
    %v712 = vpop.f32.mrb[0].mxu0
    %v713 = vadd.f32 %v172, %v712
    %714 = vdwg.mxu0
    %715 = vmatprep.subr.mxu0 %v66
    %716 = vmatpush1.msra.mxu0 %v65
    %717 = vmatprep.subr.mxu0 %v98
    %718 = vmatpush1.msra.mxu0 %v97
    %719 = vmatprep.subr.mxu0 0.0
    %720 = vmatpush1.msra.mxu0 0.0
    %721 = vmatprep.subr.mxu0 0.0
    %722 = vmatpush1.msra.mxu0 0.0
    %723 = vmatprep.subr.mxu0 0.0
    %724 = vmatpush1.msra.mxu0 0.0
    %725 = vmatprep.subr.mxu0 0.0
    %726 = vmatpush1.msra.mxu0 0.0
    %727 = vmatprep.subr.mxu0 0.0
    %728 = vmatpush1.msra.mxu0 0.0
    %729 = vmatprep.subr.mxu0 0.0
    %730 = vmatpush1.msra.mxu0 0.0
    %731 = vmatprep.subr.mxu0 0.0
    %732 = vmatpush1.msra.mxu0 0.0
    %733 = vmatprep.subr.mxu0 0.0
    %734 = vmatpush1.msra.mxu0 0.0
    %735 = vmatprep.subr.mxu0 0.0
    %736 = vmatpush1.msra.mxu0 0.0
    %737 = vmatprep.subr.mxu0 0.0
    %738 = vmatpush1.msra.mxu0 0.0
    %739 = vmatprep.subr.mxu0 0.0
    %740 = vmatpush1.msra.mxu0 0.0
    %741 = vmatprep.subr.mxu0 0.0
    %742 = vmatpush1.msra.mxu0 0.0
    %743 = vmatprep.subr.mxu0 0.0
    %744 = vmatpush1.msra.mxu0 0.0
    %745 = vmatprep.subr.mxu0 0.0
    %746 = vmatpush1.msra.mxu0 0.0
    %747 = vmatprep.subr.mxu0 0.0
    %748 = vmatpush1.msra.mxu0 0.0
    %749 = vmatprep.subr.mxu0 0.0
    %750 = vmatpush1.msra.mxu0 0.0
    %751 = vmatprep.subr.mxu0 0.0
    %752 = vmatpush1.msra.mxu0 0.0
    %753 = vmatprep.subr.mxu0 0.0
    %754 = vmatpush1.msra.mxu0 0.0
    %755 = vmatprep.subr.mxu0 0.0
    %756 = vmatpush1.msra.mxu0 0.0
    %757 = vmatprep.subr.mxu0 0.0
    %758 = vmatpush1.msra.mxu0 0.0
    %759 = vmatprep.subr.mxu0 0.0
    %760 = vmatpush1.msra.mxu0 0.0
    %761 = vmatprep.subr.mxu0 0.0
    %762 = vmatpush1.msra.mxu0 0.0
    %763 = vmatprep.subr.mxu0 0.0
    %764 = vmatpush1.msra.mxu0 0.0
    %765 = vmatprep.subr.mxu0 0.0
    %766 = vmatpush1.msra.mxu0 0.0
    %767 = vmatprep.subr.mxu0 0.0
    %768 = vmatpush1.msra.mxu0 0.0
    %769 = vmatprep.subr.mxu0 0.0
    %770 = vmatpush1.msra.mxu0 0.0
    %771 = vmatprep.subr.mxu0 0.0
    %772 = vmatpush1.msra.mxu0 0.0
    %773 = vmatprep.subr.mxu0 0.0
    %774 = vmatpush1.msra.mxu0 0.0
    %775 = vmatprep.subr.mxu0 0.0
    %776 = vmatpush1.msra.mxu0 0.0
    %777 = vmatprep.subr.mxu0 0.0
    %778 = vmatpush1.msra.mxu0 0.0
    %779 = vmatprep.mubr.f32.mxu0 0.0
    %780 = vmatmul.mubr.f32.gmra.mrb[0].mxu0 %v287
    %v781 = vpop.f32.mrb[0].mxu0
    %v782 = vadd.f32 %v176, %v781
    %v783 = vpop.f32.mrb[0].mxu0
    %v784 = vadd.f32 %v180, %v783
    %785 = vdwg.mxu0
    %786 = vmatprep.subr.mxu0 %v68
    %787 = vmatpush1.msra.mxu0 %v67
    %788 = vmatprep.subr.mxu0 %v100
    %789 = vmatpush1.msra.mxu0 %v99
    %790 = vmatprep.subr.mxu0 0.0
    %791 = vmatpush1.msra.mxu0 0.0
    %792 = vmatprep.subr.mxu0 0.0
    %793 = vmatpush1.msra.mxu0 0.0
    %794 = vmatprep.subr.mxu0 0.0
    %795 = vmatpush1.msra.mxu0 0.0
    %796 = vmatprep.subr.mxu0 0.0
    %797 = vmatpush1.msra.mxu0 0.0
    %798 = vmatprep.subr.mxu0 0.0
    %799 = vmatpush1.msra.mxu0 0.0
    %800 = vmatprep.subr.mxu0 0.0
    %801 = vmatpush1.msra.mxu0 0.0
    %802 = vmatprep.subr.mxu0 0.0
    %803 = vmatpush1.msra.mxu0 0.0
    %804 = vmatprep.subr.mxu0 0.0
    %805 = vmatpush1.msra.mxu0 0.0
    %806 = vmatprep.subr.mxu0 0.0
    %807 = vmatpush1.msra.mxu0 0.0
    %808 = vmatprep.subr.mxu0 0.0
    %809 = vmatpush1.msra.mxu0 0.0
    %810 = vmatprep.subr.mxu0 0.0
    %811 = vmatpush1.msra.mxu0 0.0
    %812 = vmatprep.subr.mxu0 0.0
    %813 = vmatpush1.msra.mxu0 0.0
    %814 = vmatprep.subr.mxu0 0.0
    %815 = vmatpush1.msra.mxu0 0.0
    %816 = vmatprep.subr.mxu0 0.0
    %817 = vmatpush1.msra.mxu0 0.0
    %818 = vmatprep.subr.mxu0 0.0
    %819 = vmatpush1.msra.mxu0 0.0
    %820 = vmatprep.subr.mxu0 0.0
    %821 = vmatpush1.msra.mxu0 0.0
    %822 = vmatprep.subr.mxu0 0.0
    %823 = vmatpush1.msra.mxu0 0.0
    %824 = vmatprep.subr.mxu0 0.0
    %825 = vmatpush1.msra.mxu0 0.0
    %826 = vmatprep.subr.mxu0 0.0
    %827 = vmatpush1.msra.mxu0 0.0
    %828 = vmatprep.subr.mxu0 0.0
    %829 = vmatpush1.msra.mxu0 0.0
    %830 = vmatprep.subr.mxu0 0.0
    %831 = vmatpush1.msra.mxu0 0.0
    %832 = vmatprep.subr.mxu0 0.0
    %833 = vmatpush1.msra.mxu0 0.0
    %834 = vmatprep.subr.mxu0 0.0
    %835 = vmatpush1.msra.mxu0 0.0
    %836 = vmatprep.subr.mxu0 0.0
    %837 = vmatpush1.msra.mxu0 0.0
    %838 = vmatprep.subr.mxu0 0.0
    %839 = vmatpush1.msra.mxu0 0.0
    %840 = vmatprep.subr.mxu0 0.0
    %841 = vmatpush1.msra.mxu0 0.0
    %842 = vmatprep.subr.mxu0 0.0
    %843 = vmatpush1.msra.mxu0 0.0
    %844 = vmatprep.subr.mxu0 0.0
    %845 = vmatpush1.msra.mxu0 0.0
    %846 = vmatprep.subr.mxu0 0.0
    %847 = vmatpush1.msra.mxu0 0.0
    %848 = vmatprep.subr.mxu0 0.0
    %849 = vmatpush1.msra.mxu0 0.0
    %850 = vmatprep.mubr.f32.mxu0 0.0
    %851 = vmatmul.mubr.f32.gmra.mrb[0].mxu0 %v287
    %v852 = vpop.f32.mrb[0].mxu0
    %v853 = vadd.f32 %v184, %v852
    %v854 = vpop.f32.mrb[0].mxu0
    %v855 = vadd.f32 %v188, %v854
    %856 = vdwg.mxu0
    %857 = vmatprep.subr.mxu0 %v70
    %858 = vmatpush1.msra.mxu0 %v69
    %859 = vmatprep.subr.mxu0 %v102
    %860 = vmatpush1.msra.mxu0 %v101
    %861 = vmatprep.subr.mxu0 0.0
    %862 = vmatpush1.msra.mxu0 0.0
    %863 = vmatprep.subr.mxu0 0.0
    %864 = vmatpush1.msra.mxu0 0.0
    %865 = vmatprep.subr.mxu0 0.0
    %866 = vmatpush1.msra.mxu0 0.0
    %867 = vmatprep.subr.mxu0 0.0
    %868 = vmatpush1.msra.mxu0 0.0
    %869 = vmatprep.subr.mxu0 0.0
    %870 = vmatpush1.msra.mxu0 0.0
    %871 = vmatprep.subr.mxu0 0.0
    %872 = vmatpush1.msra.mxu0 0.0
    %873 = vmatprep.subr.mxu0 0.0
    %874 = vmatpush1.msra.mxu0 0.0
    %875 = vmatprep.subr.mxu0 0.0
    %876 = vmatpush1.msra.mxu0 0.0
    %877 = vmatprep.subr.mxu0 0.0
    %878 = vmatpush1.msra.mxu0 0.0
    %879 = vmatprep.subr.mxu0 0.0
    %880 = vmatpush1.msra.mxu0 0.0
    %881 = vmatprep.subr.mxu0 0.0
    %882 = vmatpush1.msra.mxu0 0.0
    %883 = vmatprep.subr.mxu0 0.0
    %884 = vmatpush1.msra.mxu0 0.0
    %885 = vmatprep.subr.mxu0 0.0
    %886 = vmatpush1.msra.mxu0 0.0
    %887 = vmatprep.subr.mxu0 0.0
    %888 = vmatpush1.msra.mxu0 0.0
    %889 = vmatprep.subr.mxu0 0.0
    %890 = vmatpush1.msra.mxu0 0.0
    %891 = vmatprep.subr.mxu0 0.0
    %892 = vmatpush1.msra.mxu0 0.0
    %893 = vmatprep.subr.mxu0 0.0
    %894 = vmatpush1.msra.mxu0 0.0
    %895 = vmatprep.subr.mxu0 0.0
    %896 = vmatpush1.msra.mxu0 0.0
    %897 = vmatprep.subr.mxu0 0.0
    %898 = vmatpush1.msra.mxu0 0.0
    %899 = vmatprep.subr.mxu0 0.0
    %900 = vmatpush1.msra.mxu0 0.0
    %901 = vmatprep.subr.mxu0 0.0
    %902 = vmatpush1.msra.mxu0 0.0
    %903 = vmatprep.subr.mxu0 0.0
    %904 = vmatpush1.msra.mxu0 0.0
    %905 = vmatprep.subr.mxu0 0.0
    %906 = vmatpush1.msra.mxu0 0.0
    %907 = vmatprep.subr.mxu0 0.0
    %908 = vmatpush1.msra.mxu0 0.0
    %909 = vmatprep.subr.mxu0 0.0
    %910 = vmatpush1.msra.mxu0 0.0
    %911 = vmatprep.subr.mxu0 0.0
    %912 = vmatpush1.msra.mxu0 0.0
    %913 = vmatprep.subr.mxu0 0.0
    %914 = vmatpush1.msra.mxu0 0.0
    %915 = vmatprep.subr.mxu0 0.0
    %916 = vmatpush1.msra.mxu0 0.0
    %917 = vmatprep.subr.mxu0 0.0
    %918 = vmatpush1.msra.mxu0 0.0
    %919 = vmatprep.subr.mxu0 0.0
    %920 = vmatpush1.msra.mxu0 0.0
    %921 = vmatprep.mubr.f32.mxu0 0.0
    %922 = vmatmul.mubr.f32.gmra.mrb[0].mxu0 %v287
    %v923 = vpop.f32.mrb[0].mxu0
    %v924 = vadd.f32 %v192, %v923
    %v925 = vpop.f32.mrb[0].mxu0
    %v926 = vadd.f32 %v196, %v925
    %927 = vdwg.mxu0
    %928 = vmatprep.subr.mxu0 %v72
    %929 = vmatpush1.msra.mxu0 %v71
    %930 = vmatprep.subr.mxu0 %v104
    %931 = vmatpush1.msra.mxu0 %v103
    %932 = vmatprep.subr.mxu0 0.0
    %933 = vmatpush1.msra.mxu0 0.0
    %934 = vmatprep.subr.mxu0 0.0
    %935 = vmatpush1.msra.mxu0 0.0
    %936 = vmatprep.subr.mxu0 0.0
    %937 = vmatpush1.msra.mxu0 0.0
    %938 = vmatprep.subr.mxu0 0.0
    %939 = vmatpush1.msra.mxu0 0.0
    %940 = vmatprep.subr.mxu0 0.0
    %941 = vmatpush1.msra.mxu0 0.0
    %942 = vmatprep.subr.mxu0 0.0
    %943 = vmatpush1.msra.mxu0 0.0
    %944 = vmatprep.subr.mxu0 0.0
    %945 = vmatpush1.msra.mxu0 0.0
    %946 = vmatprep.subr.mxu0 0.0
    %947 = vmatpush1.msra.mxu0 0.0
    %948 = vmatprep.subr.mxu0 0.0
    %949 = vmatpush1.msra.mxu0 0.0
    %950 = vmatprep.subr.mxu0 0.0
    %951 = vmatpush1.msra.mxu0 0.0
    %952 = vmatprep.subr.mxu0 0.0
    %953 = vmatpush1.msra.mxu0 0.0
    %954 = vmatprep.subr.mxu0 0.0
    %955 = vmatpush1.msra.mxu0 0.0
    %956 = vmatprep.subr.mxu0 0.0
    %957 = vmatpush1.msra.mxu0 0.0
    %958 = vmatprep.subr.mxu0 0.0
    %959 = vmatpush1.msra.mxu0 0.0
    %960 = vmatprep.subr.mxu0 0.0
    %961 = vmatpush1.msra.mxu0 0.0
    %962 = vmatprep.subr.mxu0 0.0
    %963 = vmatpush1.msra.mxu0 0.0
    %964 = vmatprep.subr.mxu0 0.0
    %965 = vmatpush1.msra.mxu0 0.0
    %966 = vmatprep.subr.mxu0 0.0
    %967 = vmatpush1.msra.mxu0 0.0
    %968 = vmatprep.subr.mxu0 0.0
    %969 = vmatpush1.msra.mxu0 0.0
    %970 = vmatprep.subr.mxu0 0.0
    %971 = vmatpush1.msra.mxu0 0.0
    %972 = vmatprep.subr.mxu0 0.0
    %973 = vmatpush1.msra.mxu0 0.0
    %974 = vmatprep.subr.mxu0 0.0
    %975 = vmatpush1.msra.mxu0 0.0
    %976 = vmatprep.subr.mxu0 0.0
    %977 = vmatpush1.msra.mxu0 0.0
    %978 = vmatprep.subr.mxu0 0.0
    %979 = vmatpush1.msra.mxu0 0.0
    %980 = vmatprep.subr.mxu0 0.0
    %981 = vmatpush1.msra.mxu0 0.0
    %982 = vmatprep.subr.mxu0 0.0
    %983 = vmatpush1.msra.mxu0 0.0
    %984 = vmatprep.subr.mxu0 0.0
    %985 = vmatpush1.msra.mxu0 0.0
    %986 = vmatprep.subr.mxu0 0.0
    %987 = vmatpush1.msra.mxu0 0.0
    %988 = vmatprep.subr.mxu0 0.0
    %989 = vmatpush1.msra.mxu0 0.0
    %990 = vmatprep.subr.mxu0 0.0
    %991 = vmatpush1.msra.mxu0 0.0
    %992 = vmatprep.mubr.f32.mxu0 0.0
    %993 = vmatmul.mubr.f32.gmra.mrb[0].mxu0 %v287
    %v994 = vpop.f32.mrb[0].mxu0
    %v995 = vadd.f32 %v200, %v994
    %v996 = vpop.f32.mrb[0].mxu0
    %v997 = vadd.f32 %v204, %v996
    %998 = vdwg.mxu0
    %999 = vmatprep.subr.mxu0 %v74
    %1000 = vmatpush1.msra.mxu0 %v73
    %1001 = vmatprep.subr.mxu0 %v106
    %1002 = vmatpush1.msra.mxu0 %v105
    %1003 = vmatprep.subr.mxu0 0.0
    %1004 = vmatpush1.msra.mxu0 0.0
    %1005 = vmatprep.subr.mxu0 0.0
    %1006 = vmatpush1.msra.mxu0 0.0
    %1007 = vmatprep.subr.mxu0 0.0
    %1008 = vmatpush1.msra.mxu0 0.0
    %1009 = vmatprep.subr.mxu0 0.0
    %1010 = vmatpush1.msra.mxu0 0.0
    %1011 = vmatprep.subr.mxu0 0.0
    %1012 = vmatpush1.msra.mxu0 0.0
    %1013 = vmatprep.subr.mxu0 0.0
    %1014 = vmatpush1.msra.mxu0 0.0
    %1015 = vmatprep.subr.mxu0 0.0
    %1016 = vmatpush1.msra.mxu0 0.0
    %1017 = vmatprep.subr.mxu0 0.0
    %1018 = vmatpush1.msra.mxu0 0.0
    %1019 = vmatprep.subr.mxu0 0.0
    %1020 = vmatpush1.msra.mxu0 0.0
    %1021 = vmatprep.subr.mxu0 0.0
    %1022 = vmatpush1.msra.mxu0 0.0
    %1023 = vmatprep.subr.mxu0 0.0
    %1024 = vmatpush1.msra.mxu0 0.0
    %1025 = vmatprep.subr.mxu0 0.0
    %1026 = vmatpush1.msra.mxu0 0.0
    %1027 = vmatprep.subr.mxu0 0.0
    %1028 = vmatpush1.msra.mxu0 0.0
    %1029 = vmatprep.subr.mxu0 0.0
    %1030 = vmatpush1.msra.mxu0 0.0
    %1031 = vmatprep.subr.mxu0 0.0
    %1032 = vmatpush1.msra.mxu0 0.0
    %1033 = vmatprep.subr.mxu0 0.0
    %1034 = vmatpush1.msra.mxu0 0.0
    %1035 = vmatprep.subr.mxu0 0.0
    %1036 = vmatpush1.msra.mxu0 0.0
    %1037 = vmatprep.subr.mxu0 0.0
    %1038 = vmatpush1.msra.mxu0 0.0
    %1039 = vmatprep.subr.mxu0 0.0
    %1040 = vmatpush1.msra.mxu0 0.0
    %1041 = vmatprep.subr.mxu0 0.0
    %1042 = vmatpush1.msra.mxu0 0.0
    %1043 = vmatprep.subr.mxu0 0.0
    %1044 = vmatpush1.msra.mxu0 0.0
    %1045 = vmatprep.subr.mxu0 0.0
    %1046 = vmatpush1.msra.mxu0 0.0
    %1047 = vmatprep.subr.mxu0 0.0
    %1048 = vmatpush1.msra.mxu0 0.0
    %1049 = vmatprep.subr.mxu0 0.0
    %1050 = vmatpush1.msra.mxu0 0.0
    %1051 = vmatprep.subr.mxu0 0.0
    %1052 = vmatpush1.msra.mxu0 0.0
    %1053 = vmatprep.subr.mxu0 0.0
    %1054 = vmatpush1.msra.mxu0 0.0
    %1055 = vmatprep.subr.mxu0 0.0
    %1056 = vmatpush1.msra.mxu0 0.0
    %1057 = vmatprep.subr.mxu0 0.0
    %1058 = vmatpush1.msra.mxu0 0.0
    %1059 = vmatprep.subr.mxu0 0.0
    %1060 = vmatpush1.msra.mxu0 0.0
    %1061 = vmatprep.subr.mxu0 0.0
    %1062 = vmatpush1.msra.mxu0 0.0
    %1063 = vmatprep.mubr.f32.mxu0 0.0
    %1064 = vmatmul.mubr.f32.gmra.mrb[0].mxu0 %v287
    %v1065 = vpop.f32.mrb[0].mxu0
    %v1066 = vadd.f32 %v208, %v1065
    %v1067 = vpop.f32.mrb[0].mxu0
    %v1068 = vadd.f32 %v212, %v1067
    %1069 = vdwg.mxu0
    %1070 = vmatprep.subr.mxu0 %v76
    %1071 = vmatpush1.msra.mxu0 %v75
    %1072 = vmatprep.subr.mxu0 %v108
    %1073 = vmatpush1.msra.mxu0 %v107
    %1074 = vmatprep.subr.mxu0 0.0
    %1075 = vmatpush1.msra.mxu0 0.0
    %1076 = vmatprep.subr.mxu0 0.0
    %1077 = vmatpush1.msra.mxu0 0.0
    %1078 = vmatprep.subr.mxu0 0.0
    %1079 = vmatpush1.msra.mxu0 0.0
    %1080 = vmatprep.subr.mxu0 0.0
    %1081 = vmatpush1.msra.mxu0 0.0
    %1082 = vmatprep.subr.mxu0 0.0
    %1083 = vmatpush1.msra.mxu0 0.0
    %1084 = vmatprep.subr.mxu0 0.0
    %1085 = vmatpush1.msra.mxu0 0.0
    %1086 = vmatprep.subr.mxu0 0.0
    %1087 = vmatpush1.msra.mxu0 0.0
    %1088 = vmatprep.subr.mxu0 0.0
    %1089 = vmatpush1.msra.mxu0 0.0
    %1090 = vmatprep.subr.mxu0 0.0
    %1091 = vmatpush1.msra.mxu0 0.0
    %1092 = vmatprep.subr.mxu0 0.0
    %1093 = vmatpush1.msra.mxu0 0.0
    %1094 = vmatprep.subr.mxu0 0.0
    %1095 = vmatpush1.msra.mxu0 0.0
    %1096 = vmatprep.subr.mxu0 0.0
    %1097 = vmatpush1.msra.mxu0 0.0
    %1098 = vmatprep.subr.mxu0 0.0
    %1099 = vmatpush1.msra.mxu0 0.0
    %1100 = vmatprep.subr.mxu0 0.0
    %1101 = vmatpush1.msra.mxu0 0.0
    %1102 = vmatprep.subr.mxu0 0.0
    %1103 = vmatpush1.msra.mxu0 0.0
    %1104 = vmatprep.subr.mxu0 0.0
    %1105 = vmatpush1.msra.mxu0 0.0
    %1106 = vmatprep.subr.mxu0 0.0
    %1107 = vmatpush1.msra.mxu0 0.0
    %1108 = vmatprep.subr.mxu0 0.0
    %1109 = vmatpush1.msra.mxu0 0.0
    %1110 = vmatprep.subr.mxu0 0.0
    %1111 = vmatpush1.msra.mxu0 0.0
    %1112 = vmatprep.subr.mxu0 0.0
    %1113 = vmatpush1.msra.mxu0 0.0
    %1114 = vmatprep.subr.mxu0 0.0
    %1115 = vmatpush1.msra.mxu0 0.0
    %1116 = vmatprep.subr.mxu0 0.0
    %1117 = vmatpush1.msra.mxu0 0.0
    %1118 = vmatprep.subr.mxu0 0.0
    %1119 = vmatpush1.msra.mxu0 0.0
    %1120 = vmatprep.subr.mxu0 0.0
    %1121 = vmatpush1.msra.mxu0 0.0
    %1122 = vmatprep.subr.mxu0 0.0
    %1123 = vmatpush1.msra.mxu0 0.0
    %1124 = vmatprep.subr.mxu0 0.0
    %1125 = vmatpush1.msra.mxu0 0.0
    %1126 = vmatprep.subr.mxu0 0.0
    %1127 = vmatpush1.msra.mxu0 0.0
    %1128 = vmatprep.subr.mxu0 0.0
    %1129 = vmatpush1.msra.mxu0 0.0
    %1130 = vmatprep.subr.mxu0 0.0
    %1131 = vmatpush1.msra.mxu0 0.0
    %1132 = vmatprep.subr.mxu0 0.0
    %1133 = vmatpush1.msra.mxu0 0.0
    %1134 = vmatprep.mubr.f32.mxu0 0.0
    %1135 = vmatmul.mubr.f32.gmra.mrb[0].mxu0 %v287
    %v1136 = vpop.f32.mrb[0].mxu0
    %v1137 = vadd.f32 %v216, %v1136
    %v1138 = vpop.f32.mrb[0].mxu0
    %v1139 = vadd.f32 %v220, %v1138
    %1140 = vdwg.mxu0
    %1141 = vmatprep.subr.mxu0 %v78
    %1142 = vmatpush1.msra.mxu0 %v77
    %1143 = vmatprep.subr.mxu0 %v110
    %1144 = vmatpush1.msra.mxu0 %v109
    %1145 = vmatprep.subr.mxu0 0.0
    %1146 = vmatpush1.msra.mxu0 0.0
    %1147 = vmatprep.subr.mxu0 0.0
    %1148 = vmatpush1.msra.mxu0 0.0
    %1149 = vmatprep.subr.mxu0 0.0
    %1150 = vmatpush1.msra.mxu0 0.0
    %1151 = vmatprep.subr.mxu0 0.0
    %1152 = vmatpush1.msra.mxu0 0.0
    %1153 = vmatprep.subr.mxu0 0.0
    %1154 = vmatpush1.msra.mxu0 0.0
    %1155 = vmatprep.subr.mxu0 0.0
    %1156 = vmatpush1.msra.mxu0 0.0
    %1157 = vmatprep.subr.mxu0 0.0
    %1158 = vmatpush1.msra.mxu0 0.0
    %1159 = vmatprep.subr.mxu0 0.0
    %1160 = vmatpush1.msra.mxu0 0.0
    %1161 = vmatprep.subr.mxu0 0.0
    %1162 = vmatpush1.msra.mxu0 0.0
    %1163 = vmatprep.subr.mxu0 0.0
    %1164 = vmatpush1.msra.mxu0 0.0
    %1165 = vmatprep.subr.mxu0 0.0
    %1166 = vmatpush1.msra.mxu0 0.0
    %1167 = vmatprep.subr.mxu0 0.0
    %1168 = vmatpush1.msra.mxu0 0.0
    %1169 = vmatprep.subr.mxu0 0.0
    %1170 = vmatpush1.msra.mxu0 0.0
    %1171 = vmatprep.subr.mxu0 0.0
    %1172 = vmatpush1.msra.mxu0 0.0
    %1173 = vmatprep.subr.mxu0 0.0
    %1174 = vmatpush1.msra.mxu0 0.0
    %1175 = vmatprep.subr.mxu0 0.0
    %1176 = vmatpush1.msra.mxu0 0.0
    %1177 = vmatprep.subr.mxu0 0.0
    %1178 = vmatpush1.msra.mxu0 0.0
    %1179 = vmatprep.subr.mxu0 0.0
    %1180 = vmatpush1.msra.mxu0 0.0
    %1181 = vmatprep.subr.mxu0 0.0
    %1182 = vmatpush1.msra.mxu0 0.0
    %1183 = vmatprep.subr.mxu0 0.0
    %1184 = vmatpush1.msra.mxu0 0.0
    %1185 = vmatprep.subr.mxu0 0.0
    %1186 = vmatpush1.msra.mxu0 0.0
    %1187 = vmatprep.subr.mxu0 0.0
    %1188 = vmatpush1.msra.mxu0 0.0
    %1189 = vmatprep.subr.mxu0 0.0
    %1190 = vmatpush1.msra.mxu0 0.0
    %1191 = vmatprep.subr.mxu0 0.0
    %1192 = vmatpush1.msra.mxu0 0.0
    %1193 = vmatprep.subr.mxu0 0.0
    %1194 = vmatpush1.msra.mxu0 0.0
    %1195 = vmatprep.subr.mxu0 0.0
    %1196 = vmatpush1.msra.mxu0 0.0
    %1197 = vmatprep.subr.mxu0 0.0
    %1198 = vmatpush1.msra.mxu0 0.0
    %1199 = vmatprep.subr.mxu0 0.0
    %1200 = vmatpush1.msra.mxu0 0.0
    %1201 = vmatprep.subr.mxu0 0.0
    %1202 = vmatpush1.msra.mxu0 0.0
    %1203 = vmatprep.subr.mxu0 0.0
    %1204 = vmatpush1.msra.mxu0 0.0
    %1205 = vmatprep.mubr.f32.mxu0 0.0
    %1206 = vmatmul.mubr.f32.gmra.mrb[0].mxu0 %v287
    %v1207 = vpop.f32.mrb[0].mxu0
    %v1208 = vadd.f32 %v224, %v1207
    %v1209 = vpop.f32.mrb[0].mxu0
    %v1210 = vadd.f32 %v228, %v1209
    %1211 = vdwg.mxu0
    %1212 = vmatprep.subr.mxu0 %v80
    %1213 = vmatpush1.msra.mxu0 %v79
    %1214 = vmatprep.subr.mxu0 %v112
    %1215 = vmatpush1.msra.mxu0 %v111
    %1216 = vmatprep.subr.mxu0 0.0
    %1217 = vmatpush1.msra.mxu0 0.0
    %1218 = vmatprep.subr.mxu0 0.0
    %1219 = vmatpush1.msra.mxu0 0.0
    %1220 = vmatprep.subr.mxu0 0.0
    %1221 = vmatpush1.msra.mxu0 0.0
    %1222 = vmatprep.subr.mxu0 0.0
    %1223 = vmatpush1.msra.mxu0 0.0
    %1224 = vmatprep.subr.mxu0 0.0
    %1225 = vmatpush1.msra.mxu0 0.0
    %1226 = vmatprep.subr.mxu0 0.0
    %1227 = vmatpush1.msra.mxu0 0.0
    %1228 = vmatprep.subr.mxu0 0.0
    %1229 = vmatpush1.msra.mxu0 0.0
    %1230 = vmatprep.subr.mxu0 0.0
    %1231 = vmatpush1.msra.mxu0 0.0
    %1232 = vmatprep.subr.mxu0 0.0
    %1233 = vmatpush1.msra.mxu0 0.0
    %1234 = vmatprep.subr.mxu0 0.0
    %1235 = vmatpush1.msra.mxu0 0.0
    %1236 = vmatprep.subr.mxu0 0.0
    %1237 = vmatpush1.msra.mxu0 0.0
    %1238 = vmatprep.subr.mxu0 0.0
    %1239 = vmatpush1.msra.mxu0 0.0
    %1240 = vmatprep.subr.mxu0 0.0
    %1241 = vmatpush1.msra.mxu0 0.0
    %1242 = vmatprep.subr.mxu0 0.0
    %1243 = vmatpush1.msra.mxu0 0.0
    %1244 = vmatprep.subr.mxu0 0.0
    %1245 = vmatpush1.msra.mxu0 0.0
    %1246 = vmatprep.subr.mxu0 0.0
    %1247 = vmatpush1.msra.mxu0 0.0
    %1248 = vmatprep.subr.mxu0 0.0
    %1249 = vmatpush1.msra.mxu0 0.0
    %1250 = vmatprep.subr.mxu0 0.0
    %1251 = vmatpush1.msra.mxu0 0.0
    %1252 = vmatprep.subr.mxu0 0.0
    %1253 = vmatpush1.msra.mxu0 0.0
    %1254 = vmatprep.subr.mxu0 0.0
    %1255 = vmatpush1.msra.mxu0 0.0
    %1256 = vmatprep.subr.mxu0 0.0
    %1257 = vmatpush1.msra.mxu0 0.0
    %1258 = vmatprep.subr.mxu0 0.0
    %1259 = vmatpush1.msra.mxu0 0.0
    %1260 = vmatprep.subr.mxu0 0.0
    %1261 = vmatpush1.msra.mxu0 0.0
    %1262 = vmatprep.subr.mxu0 0.0
    %1263 = vmatpush1.msra.mxu0 0.0
    %1264 = vmatprep.subr.mxu0 0.0
    %1265 = vmatpush1.msra.mxu0 0.0
    %1266 = vmatprep.subr.mxu0 0.0
    %1267 = vmatpush1.msra.mxu0 0.0
    %1268 = vmatprep.subr.mxu0 0.0
    %1269 = vmatpush1.msra.mxu0 0.0
    %1270 = vmatprep.subr.mxu0 0.0
    %1271 = vmatpush1.msra.mxu0 0.0
    %1272 = vmatprep.subr.mxu0 0.0
    %1273 = vmatpush1.msra.mxu0 0.0
    %1274 = vmatprep.subr.mxu0 0.0
    %1275 = vmatpush1.msra.mxu0 0.0
    %1276 = vmatprep.mubr.f32.mxu0 0.0
    %1277 = vmatmul.mubr.f32.gmra.mrb[0].mxu0 %v287
    %v1278 = vpop.f32.mrb[0].mxu0
    %v1279 = vadd.f32 %v232, %v1278
    %v1280 = vpop.f32.mrb[0].mxu0
    %v1281 = vadd.f32 %v236, %v1280
    %1282 = vdwg.mxu0
    %1283 = vmatprep.subr.mxu0 %v82
    %1284 = vmatpush1.msra.mxu0 %v81
    %1285 = vmatprep.subr.mxu0 %v114
    %1286 = vmatpush1.msra.mxu0 %v113
    %1287 = vmatprep.subr.mxu0 0.0
    %1288 = vmatpush1.msra.mxu0 0.0
    %1289 = vmatprep.subr.mxu0 0.0
    %1290 = vmatpush1.msra.mxu0 0.0
    %1291 = vmatprep.subr.mxu0 0.0
    %1292 = vmatpush1.msra.mxu0 0.0
    %1293 = vmatprep.subr.mxu0 0.0
    %1294 = vmatpush1.msra.mxu0 0.0
    %1295 = vmatprep.subr.mxu0 0.0
    %1296 = vmatpush1.msra.mxu0 0.0
    %1297 = vmatprep.subr.mxu0 0.0
    %1298 = vmatpush1.msra.mxu0 0.0
    %1299 = vmatprep.subr.mxu0 0.0
    %1300 = vmatpush1.msra.mxu0 0.0
    %1301 = vmatprep.subr.mxu0 0.0
    %1302 = vmatpush1.msra.mxu0 0.0
    %1303 = vmatprep.subr.mxu0 0.0
    %1304 = vmatpush1.msra.mxu0 0.0
    %1305 = vmatprep.subr.mxu0 0.0
    %1306 = vmatpush1.msra.mxu0 0.0
    %1307 = vmatprep.subr.mxu0 0.0
    %1308 = vmatpush1.msra.mxu0 0.0
    %1309 = vmatprep.subr.mxu0 0.0
    %1310 = vmatpush1.msra.mxu0 0.0
    %1311 = vmatprep.subr.mxu0 0.0
    %1312 = vmatpush1.msra.mxu0 0.0
    %1313 = vmatprep.subr.mxu0 0.0
    %1314 = vmatpush1.msra.mxu0 0.0
    %1315 = vmatprep.subr.mxu0 0.0
    %1316 = vmatpush1.msra.mxu0 0.0
    %1317 = vmatprep.subr.mxu0 0.0
    %1318 = vmatpush1.msra.mxu0 0.0
    %1319 = vmatprep.subr.mxu0 0.0
    %1320 = vmatpush1.msra.mxu0 0.0
    %1321 = vmatprep.subr.mxu0 0.0
    %1322 = vmatpush1.msra.mxu0 0.0
    %1323 = vmatprep.subr.mxu0 0.0
    %1324 = vmatpush1.msra.mxu0 0.0
    %1325 = vmatprep.subr.mxu0 0.0
    %1326 = vmatpush1.msra.mxu0 0.0
    %1327 = vmatprep.subr.mxu0 0.0
    %1328 = vmatpush1.msra.mxu0 0.0
    %1329 = vmatprep.subr.mxu0 0.0
    %1330 = vmatpush1.msra.mxu0 0.0
    %1331 = vmatprep.subr.mxu0 0.0
    %1332 = vmatpush1.msra.mxu0 0.0
    %1333 = vmatprep.subr.mxu0 0.0
    %1334 = vmatpush1.msra.mxu0 0.0
    %1335 = vmatprep.subr.mxu0 0.0
    %1336 = vmatpush1.msra.mxu0 0.0
    %1337 = vmatprep.subr.mxu0 0.0
    %1338 = vmatpush1.msra.mxu0 0.0
    %1339 = vmatprep.subr.mxu0 0.0
    %1340 = vmatpush1.msra.mxu0 0.0
    %1341 = vmatprep.subr.mxu0 0.0
    %1342 = vmatpush1.msra.mxu0 0.0
    %1343 = vmatprep.subr.mxu0 0.0
    %1344 = vmatpush1.msra.mxu0 0.0
    %1345 = vmatprep.subr.mxu0 0.0
    %1346 = vmatpush1.msra.mxu0 0.0
    %1347 = vmatprep.mubr.f32.mxu0 0.0
    %1348 = vmatmul.mubr.f32.gmra.mrb[0].mxu0 %v287
    %v1349 = vpop.f32.mrb[0].mxu0
    %v1350 = vadd.f32 %v240, %v1349
    %v1351 = vpop.f32.mrb[0].mxu0
    %v1352 = vadd.f32 %v244, %v1351
    %1353 = vdwg.mxu0
    %1354 = vmatprep.subr.mxu0 %v84
    %1355 = vmatpush1.msra.mxu0 %v83
    %1356 = vmatprep.subr.mxu0 %v116
    %1357 = vmatpush1.msra.mxu0 %v115
    %1358 = vmatprep.subr.mxu0 0.0
    %1359 = vmatpush1.msra.mxu0 0.0
    %1360 = vmatprep.subr.mxu0 0.0
    %1361 = vmatpush1.msra.mxu0 0.0
    %1362 = vmatprep.subr.mxu0 0.0
    %1363 = vmatpush1.msra.mxu0 0.0
    %1364 = vmatprep.subr.mxu0 0.0
    %1365 = vmatpush1.msra.mxu0 0.0
    %1366 = vmatprep.subr.mxu0 0.0
    %1367 = vmatpush1.msra.mxu0 0.0
    %1368 = vmatprep.subr.mxu0 0.0
    %1369 = vmatpush1.msra.mxu0 0.0
    %1370 = vmatprep.subr.mxu0 0.0
    %1371 = vmatpush1.msra.mxu0 0.0
    %1372 = vmatprep.subr.mxu0 0.0
    %1373 = vmatpush1.msra.mxu0 0.0
    %1374 = vmatprep.subr.mxu0 0.0
    %1375 = vmatpush1.msra.mxu0 0.0
    %1376 = vmatprep.subr.mxu0 0.0
    %1377 = vmatpush1.msra.mxu0 0.0
    %1378 = vmatprep.subr.mxu0 0.0
    %1379 = vmatpush1.msra.mxu0 0.0
    %1380 = vmatprep.subr.mxu0 0.0
    %1381 = vmatpush1.msra.mxu0 0.0
    %1382 = vmatprep.subr.mxu0 0.0
    %1383 = vmatpush1.msra.mxu0 0.0
    %1384 = vmatprep.subr.mxu0 0.0
    %1385 = vmatpush1.msra.mxu0 0.0
    %1386 = vmatprep.subr.mxu0 0.0
    %1387 = vmatpush1.msra.mxu0 0.0
    %1388 = vmatprep.subr.mxu0 0.0
    %1389 = vmatpush1.msra.mxu0 0.0
    %1390 = vmatprep.subr.mxu0 0.0
    %1391 = vmatpush1.msra.mxu0 0.0
    %1392 = vmatprep.subr.mxu0 0.0
    %1393 = vmatpush1.msra.mxu0 0.0
    %1394 = vmatprep.subr.mxu0 0.0
    %1395 = vmatpush1.msra.mxu0 0.0
    %1396 = vmatprep.subr.mxu0 0.0
    %1397 = vmatpush1.msra.mxu0 0.0
    %1398 = vmatprep.subr.mxu0 0.0
    %1399 = vmatpush1.msra.mxu0 0.0
    %1400 = vmatprep.subr.mxu0 0.0
    %1401 = vmatpush1.msra.mxu0 0.0
    %1402 = vmatprep.subr.mxu0 0.0
    %1403 = vmatpush1.msra.mxu0 0.0
    %1404 = vmatprep.subr.mxu0 0.0
    %1405 = vmatpush1.msra.mxu0 0.0
    %1406 = vmatprep.subr.mxu0 0.0
    %1407 = vmatpush1.msra.mxu0 0.0
    %1408 = vmatprep.subr.mxu0 0.0
    %1409 = vmatpush1.msra.mxu0 0.0
    %1410 = vmatprep.subr.mxu0 0.0
    %1411 = vmatpush1.msra.mxu0 0.0
    %1412 = vmatprep.subr.mxu0 0.0
    %1413 = vmatpush1.msra.mxu0 0.0
    %1414 = vmatprep.subr.mxu0 0.0
    %1415 = vmatpush1.msra.mxu0 0.0
    %1416 = vmatprep.subr.mxu0 0.0
    %1417 = vmatpush1.msra.mxu0 0.0
    %1418 = vmatprep.mubr.f32.mxu0 0.0
    %1419 = vmatmul.mubr.f32.gmra.mrb[0].mxu0 %v287
    %v1420 = vpop.f32.mrb[0].mxu0
    %v1421 = vadd.f32 %v248, %v1420
    %v1422 = vpop.f32.mrb[0].mxu0
    %v1423 = vadd.f32 %v252, %v1422
    %1424 = vdwg.mxu0
    %v1457 = vcombine.low %v356, %v358
    %v1458 = vcombine.low %v427, %v429
    %v1460 = vunpack.c.l.s4 1983009808
    %v1461 = vunpack.c.0.s8 %v1460
    %v1462 = vlaneseq
    %v1463 = vshrl.u32 %v1462, 7
    %v1464 = vsub.s32 %v1461, %v1463
    %v1465 = vrot.slane %v1457, %v1464
    %v1467 = vunpack.c.l.s4 1983009808
    %v1468 = vunpack.c.0.s8 %v1467
    %v1469 = vlaneseq
    %v1470 = vshrl.u32 %v1469, 7
    %v1471 = vsub.s32 %v1468, %v1470
    %v1472 = vrot.slane %v1458, %v1471
    %v1473 = vcombine.low %v1465, %v1472
    %v1474 = vcombine.low %v498, %v500
    %v1475 = vcombine.low %v569, %v571
    %v1477 = vunpack.c.l.s4 1983009808
    %v1478 = vunpack.c.0.s8 %v1477
    %v1479 = vlaneseq
    %v1480 = vshrl.u32 %v1479, 7
    %v1481 = vsub.s32 %v1478, %v1480
    %v1482 = vrot.slane %v1474, %v1481
    %v1484 = vunpack.c.l.s4 1983009808
    %v1485 = vunpack.c.0.s8 %v1484
    %v1486 = vlaneseq
    %v1487 = vshrl.u32 %v1486, 7
    %v1488 = vsub.s32 %v1485, %v1487
    %v1489 = vrot.slane %v1475, %v1488
    %v1490 = vcombine.low %v1482, %v1489
    %v1491 = vcombine.low %v640, %v642
    %v1492 = vcombine.low %v711, %v713
    %v1494 = vunpack.c.l.s4 1983009808
    %v1495 = vunpack.c.0.s8 %v1494
    %v1496 = vlaneseq
    %v1497 = vshrl.u32 %v1496, 7
    %v1498 = vsub.s32 %v1495, %v1497
    %v1499 = vrot.slane %v1491, %v1498
    %v1501 = vunpack.c.l.s4 1983009808
    %v1502 = vunpack.c.0.s8 %v1501
    %v1503 = vlaneseq
    %v1504 = vshrl.u32 %v1503, 7
    %v1505 = vsub.s32 %v1502, %v1504
    %v1506 = vrot.slane %v1492, %v1505
    %v1507 = vcombine.low %v1499, %v1506
    %v1508 = vcombine.low %v782, %v784
    %v1509 = vcombine.low %v853, %v855
    %v1511 = vunpack.c.l.s4 1983009808
    %v1512 = vunpack.c.0.s8 %v1511
    %v1513 = vlaneseq
    %v1514 = vshrl.u32 %v1513, 7
    %v1515 = vsub.s32 %v1512, %v1514
    %v1516 = vrot.slane %v1508, %v1515
    %v1518 = vunpack.c.l.s4 1983009808
    %v1519 = vunpack.c.0.s8 %v1518
    %v1520 = vlaneseq
    %v1521 = vshrl.u32 %v1520, 7
    %v1522 = vsub.s32 %v1519, %v1521
    %v1523 = vrot.slane %v1509, %v1522
    %v1524 = vcombine.low %v1516, %v1523
    %v1525 = vcombine.low %v924, %v926
    %v1526 = vcombine.low %v995, %v997
    %v1528 = vunpack.c.l.s4 1983009808
    %v1529 = vunpack.c.0.s8 %v1528
    %v1530 = vlaneseq
    %v1531 = vshrl.u32 %v1530, 7
    %v1532 = vsub.s32 %v1529, %v1531
    %v1533 = vrot.slane %v1525, %v1532
    %v1535 = vunpack.c.l.s4 1983009808
    %v1536 = vunpack.c.0.s8 %v1535
    %v1537 = vlaneseq
    %v1538 = vshrl.u32 %v1537, 7
    %v1539 = vsub.s32 %v1536, %v1538
    %v1540 = vrot.slane %v1526, %v1539
    %v1541 = vcombine.low %v1533, %v1540
    %v1542 = vcombine.low %v1066, %v1068
    %v1543 = vcombine.low %v1137, %v1139
    %v1545 = vunpack.c.l.s4 1983009808
    %v1546 = vunpack.c.0.s8 %v1545
    %v1547 = vlaneseq
    %v1548 = vshrl.u32 %v1547, 7
    %v1549 = vsub.s32 %v1546, %v1548
    %v1550 = vrot.slane %v1542, %v1549
    %v1552 = vunpack.c.l.s4 1983009808
    %v1553 = vunpack.c.0.s8 %v1552
    %v1554 = vlaneseq
    %v1555 = vshrl.u32 %v1554, 7
    %v1556 = vsub.s32 %v1553, %v1555
    %v1557 = vrot.slane %v1543, %v1556
    %v1558 = vcombine.low %v1550, %v1557
    %v1559 = vcombine.low %v1208, %v1210
    %v1560 = vcombine.low %v1279, %v1281
    %v1562 = vunpack.c.l.s4 1983009808
    %v1563 = vunpack.c.0.s8 %v1562
    %v1564 = vlaneseq
    %v1565 = vshrl.u32 %v1564, 7
    %v1566 = vsub.s32 %v1563, %v1565
    %v1567 = vrot.slane %v1559, %v1566
    %v1569 = vunpack.c.l.s4 1983009808
    %v1570 = vunpack.c.0.s8 %v1569
    %v1571 = vlaneseq
    %v1572 = vshrl.u32 %v1571, 7
    %v1573 = vsub.s32 %v1570, %v1572
    %v1574 = vrot.slane %v1560, %v1573
    %v1575 = vcombine.low %v1567, %v1574
    %v1576 = vcombine.low %v1350, %v1352
    %v1577 = vcombine.low %v1421, %v1423
    %v1579 = vunpack.c.l.s4 1983009808
    %v1580 = vunpack.c.0.s8 %v1579
    %v1581 = vlaneseq
    %v1582 = vshrl.u32 %v1581, 7
    %v1583 = vsub.s32 %v1580, %v1582
    %v1584 = vrot.slane %v1576, %v1583
    %v1586 = vunpack.c.l.s4 1983009808
    %v1587 = vunpack.c.0.s8 %v1586
    %v1588 = vlaneseq
    %v1589 = vshrl.u32 %v1588, 7
    %v1590 = vsub.s32 %v1587, %v1589
    %v1591 = vrot.slane %v1577, %v1590
    %v1592 = vcombine.low %v1584, %v1591
    %1601 = vst [vmem:[#allocation8] sm:$0xff] %v1473
    %1602 = vst [vmem:[#allocation8 + $0x8] sm:$0xff] %v1490
    %1603 = vst [vmem:[#allocation8 + $0x10] sm:$0xff] %v1507
    %1604 = vst [vmem:[#allocation8 + $0x18] sm:$0xff] %v1524
    %1605 = vst [vmem:[#allocation8 + $0x20] sm:$0xff] %v1541
    %1606 = vst [vmem:[#allocation8 + $0x28] sm:$0xff] %v1558
    %1607 = vst [vmem:[#allocation8 + $0x30] sm:$0xff] %v1575
    %1608 = vst [vmem:[#allocation8 + $0x38] sm:$0xff] %v1592
    // Predicated region
    $region26: #{tpu_custom_call.1} parent=1 // pred_check
      _
    $region27: #{tpu_custom_call.1} parent=1 // pred_check_branch
      %1610 = sbr.rel (0) target = $region29
    $region28: #{tpu_custom_call.1} parent=1 // pred_region
      %s1612 = ssub.s32 1024, 1024
      %1613 = vsyncadd [#allocation4], %s1612
      %s1615 = sshll.u32 [#allocation8], 4
      %s1616 = int_to_ptr.vmem [resolvable:$true] %s1615
      %1618 = dma.vmem_to_hbm [thread:$0]  %s1616, 1024, %s3, [#allocation4]
    $region29: #{tpu_custom_call.1} parent=1 // pred_fallthru
      _
    // Predicated region
    $region30: #{tpu_custom_call.1} parent=1 // pred_check
      _
    $region31: #{tpu_custom_call.1} parent=1 // pred_check_branch
      %1620 = sbr.rel (0) target = $region33
    $region32: #{tpu_custom_call.1} parent=1 // pred_region
      %1621 = dma.done [#allocation4], 1024
    $region33: #{tpu_custom_call.1} parent=1 // pred_fallthru
      _
    %1622 = vsyncpa [#allocation3], 1
    %1623 = vsyncpa [#allocation6], 1
    %1624 = vsyncpa [#allocation4], 1

</llo_original>
